<compile_context>
chip_gen: v5e
topology: v5e:2x2
jax: 0.10.0
libtpu: 0.0.40
codegen_flags: <defaults>
</compile_context>

<pallas_src>
import functools
import math

import jax
import jax.numpy as jnp
from jax.experimental import pallas as pl
from jax.experimental.pallas import tpu as pltpu


def _layernorm(x, gamma, beta, eps=1e-5):
    # PyTorch nn.LayerNorm: biased variance over last dim, eps=1e-5.
    mu = jnp.mean(x, axis=-1, keepdims=True)
    var = jnp.mean((x - mu) ** 2, axis=-1, keepdims=True)
    return (x - mu) * jax.lax.rsqrt(var + eps) * gamma + beta


def transformer_block_kernel(
        xf_ref, wk_ref, wq_ref, wv_ref, wu_ref, w1_ref, w2_ref,
        vec_ref, bf1_ref, o_ref, k_scr, v_scr, ctx_scr, *, num_heads, mask):
    f32 = jnp.float32
    bf16 = jnp.bfloat16
    qi = pl.program_id(1)
    _, TQ, E = o_ref.shape
    S = xf_ref.shape[1]
    hd = E // num_heads

    # K / V projection for the whole sequence: once per batch element (qi == 0),
    # kept resident as bf16 VMEM scratch across the seq-tile grid axis.
    @pl.when(qi == 0)
    def _():
        xs = xf_ref[0].astype(bf16)                              # (S, E)
        k_scr[...] = jnp.dot(xs, wk_ref[...],
                             preferred_element_type=f32).astype(bf16)
        v_scr[...] = jnp.dot(xs, wv_ref[...],
                             preferred_element_type=f32).astype(bf16)

    # Query / residual tile: sublane-aligned slice of the full-sequence block
    # (no separate per-tile x DMA needed).
    q_start = pl.multiple_of(qi * TQ, TQ)
    xq = xf_ref[0, pl.ds(q_start, TQ), :]                        # (TQ, E) f32 residual path

    # fold both 1/emb**0.25 factors into q only.
    q = jnp.dot(xq.astype(bf16), wq_ref[...], preferred_element_type=f32)
    q = (q * (float(E) ** -0.5)).astype(bf16)                    # (TQ, E)

    k_all = k_scr[...]                                           # (S, E) bf16
    v_all = v_scr[...]                                           # (S, E) bf16

    if mask:
        row = jax.lax.broadcasted_iota(jnp.int32, (TQ, S), 0) + qi * TQ
        col = jax.lax.broadcasted_iota(jnp.int32, (TQ, S), 1)
        neg = jnp.where(col > row, -jnp.inf, 0.0).astype(f32)

    # Per-head scores / weighted sum (score contraction K=hd is inherent to MHA);
    # per-head context goes into ctx_scr so unify_heads becomes ONE K=E matmul.
    for h in range(num_heads):
        sl = slice(h * hd, (h + 1) * hd)
        s = jax.lax.dot_general(q[:, sl], k_all[:, sl],
                                (((1,), (1,)), ((), ())),
                                preferred_element_type=f32)      # (TQ, S)
        if mask:
            s = s + neg
        s = s - jnp.max(s, axis=-1, keepdims=True)
        p = jnp.exp(s)
        inv = pl.reciprocal(jnp.sum(p, axis=-1, keepdims=True), approx=False)
        p = (p * inv).astype(bf16)
        ctx_scr[:, sl] = jnp.dot(p, v_all[:, sl], preferred_element_type=f32)

    vec = vec_ref[...]                                           # (6, E) packed vectors
    bu, g1, b1 = vec[0:1], vec[1:2], vec[2:3]
    bf2, g2, b2 = vec[3:4], vec[4:5], vec[5:6]

    att = jnp.dot(ctx_scr[...].astype(bf16), wu_ref[...],
                  preferred_element_type=f32) + bu               # (TQ, E)

    # residual + norm1 (dropout p=0.0 -> identity)
    y = _layernorm(xq + att, g1, b1)

    # feed-forward: Linear -> ReLU -> Linear
    h1 = jnp.maximum(
        jnp.dot(y.astype(bf16), w1_ref[...], preferred_element_type=f32)
        + bf1_ref[...], 0.0)                                     # (TQ, FF)
    ff = jnp.dot(h1.astype(bf16), w2_ref[...], preferred_element_type=f32) + bf2

    # residual + norm2
    o_ref[0] = _layernorm(ff + y, g2, b2)


def transformer_block(x, params, *, num_heads, mask, seq_tile=None):
    B, S, E = x.shape
    FF = params["w1"].shape[1]
    if seq_tile is None:
        seq_tile = S if S <= 256 else 256
    assert S % seq_tile == 0 and (seq_tile % 8 == 0 or seq_tile == S)
    nq = S // seq_tile

    bf16 = jnp.bfloat16
    wk = params["wk"].astype(bf16)
    wq = params["wq"].astype(bf16)
    wv = params["wv"].astype(bf16)
    wu = params["wu"].astype(bf16)
    w1 = params["w1"].astype(bf16)
    w2 = params["w2"].astype(bf16)
    # Pack the (1,E) per-channel vectors into one block -> one DMA / pipeline buffer.
    vecs = jnp.concatenate([params["bu"], params["g1"], params["beta1"],
                            params["bf2"], params["g2"], params["beta2"]], axis=0)
    bf1 = params["bf1"]

    kernel = functools.partial(transformer_block_kernel,
                               num_heads=num_heads, mask=mask)

    cost = pl.CostEstimate(
        flops=int(B * (8 * S * E * E + 4 * S * S * E + 4 * S * E * FF)),
        transcendentals=int(B * num_heads * S * S),
        bytes_accessed=int(8 * B * S * E + 2 * (4 * E * E + 2 * E * FF)))

    def const(shape):
        return pl.BlockSpec(shape, lambda b, q: (0, 0))

    grid_spec = pltpu.PrefetchScalarGridSpec(
        num_scalar_prefetch=0,
        grid=(B, nq),
        in_specs=[
            pl.BlockSpec((1, S, E), lambda b, q: (b, 0, 0)),   # x, full sequence (queries + K/V)
            const((E, E)), const((E, E)), const((E, E)), const((E, E)),
            const((E, FF)), const((FF, E)),
            const((6, E)), const((1, FF)),
        ],
        out_specs=pl.BlockSpec((1, seq_tile, E), lambda b, q: (b, q, 0)),
        scratch_shapes=[
            pltpu.VMEM((S, E), bf16),                  # K (whole sequence)
            pltpu.VMEM((S, E), bf16),                  # V (whole sequence)
            pltpu.VMEM((seq_tile, E), jnp.float32),    # per-head context -> one unify matmul
        ])

    return pl.pallas_call(
        kernel,
        out_shape=jax.ShapeDtypeStruct((B, S, E), jnp.float32),
        grid_spec=grid_spec,
        compiler_params=pltpu.CompilerParams(
            dimension_semantics=("parallel", "arbitrary"),
            vmem_limit_bytes=48 * 1024 * 1024),
        cost_estimate=cost,
    )(x, wk, wq, wv, wu, w1, w2, vecs, bf1)


def reference_f32(x, p, *, num_heads, mask):
    """Pure-JAX f32 reference matching the PyTorch forward exactly."""
    B, S, E = x.shape
    hd = E // num_heads
    scale = float(E) ** 0.25
    k = (x @ p["wk"]) / scale
    q = (x @ p["wq"]) / scale
    v = x @ p["wv"]
    k = k.reshape(B, S, num_heads, hd).transpose(0, 2, 1, 3)
    q = q.reshape(B, S, num_heads, hd).transpose(0, 2, 1, 3)
    v = v.reshape(B, S, num_heads, hd).transpose(0, 2, 1, 3)
    dot = jnp.einsum("bhqd,bhkd->bhqk", q, k)
    if mask:
        row = jnp.arange(S)[:, None]
        col = jnp.arange(S)[None, :]
        dot = jnp.where(col > row, -jnp.inf, dot)
    dot = jax.nn.softmax(dot, axis=-1)
    out = jnp.einsum("bhqk,bhkd->bhqd", dot, v).transpose(0, 2, 1, 3).reshape(B, S, E)
    att = out @ p["wu"] + p["bu"][0]

    def ln(z, g, b, eps=1e-5):
        mu = jnp.mean(z, axis=-1, keepdims=True)
        var = jnp.mean((z - mu) ** 2, axis=-1, keepdims=True)
        return (z - mu) / jnp.sqrt(var + eps) * g[0] + b[0]

    y = ln(x + att, p["g1"], p["beta1"])
    ff = jnp.maximum(y @ p["w1"] + p["bf1"][0], 0.0) @ p["w2"] + p["bf2"][0]
    return ln(ff + y, p["g2"], p["beta2"])


def reference_mixed(x, p, *, num_heads, mask):
    """Pure-JAX reference mirroring the kernel's bf16-operand / f32-accumulate scheme."""
    B, S, E = x.shape
    hd = E // num_heads
    bf, f32 = jnp.bfloat16, jnp.float32
    x_bf = x.astype(bf)
    wk, wq, wv = p["wk"].astype(bf), p["wq"].astype(bf), p["wv"].astype(bf)
    wu, w1, w2 = p["wu"].astype(bf), p["w1"].astype(bf), p["w2"].astype(bf)

    k = jnp.einsum("bse,ef->bsf", x_bf, wk, preferred_element_type=f32).astype(bf)
    v = jnp.einsum("bse,ef->bsf", x_bf, wv, preferred_element_type=f32).astype(bf)
    q = (jnp.einsum("bse,ef->bsf", x_bf, wq, preferred_element_type=f32)
         * (float(E) ** -0.5)).astype(bf)

    qh = q.reshape(B, S, num_heads, hd)
    kh = k.reshape(B, S, num_heads, hd)
    vh = v.reshape(B, S, num_heads, hd)
    s = jnp.einsum("bqhd,bkhd->bhqk", qh, kh, preferred_element_type=f32)
    if mask:
        row = jnp.arange(S)[:, None]
        col = jnp.arange(S)[None, :]
        s = s + jnp.where(col > row, -jnp.inf, 0.0)
    s = s - jnp.max(s, axis=-1, keepdims=True)
    pr = jnp.exp(s)
    pr = (pr / jnp.sum(pr, axis=-1, keepdims=True)).astype(bf)
    ctx = jnp.einsum("bhqk,bkhd->bqhd", pr, vh,
                     preferred_element_type=f32).astype(bf).reshape(B, S, E)
    att = jnp.einsum("bse,ef->bsf", ctx, wu, preferred_element_type=f32) + p["bu"][0]

    def ln(z, g, b, eps=1e-5):
        mu = jnp.mean(z, axis=-1, keepdims=True)
        var = jnp.mean((z - mu) ** 2, axis=-1, keepdims=True)
        return (z - mu) * jax.lax.rsqrt(var + eps) * g[0] + b[0]

    y = ln(x + att, p["g1"], p["beta1"])
    h1 = jnp.maximum(
        jnp.einsum("bse,ef->bsf", y.astype(bf), w1, preferred_element_type=f32)
        + p["bf1"][0], 0.0)
    ff = jnp.einsum("bsf,fe->bse", h1.astype(bf), w2,
                    preferred_element_type=f32) + p["bf2"][0]
    return ln(ff + y, p["g2"], p["beta2"])


def make_params(key, emb, ff_hidden_mult=4):
    ks = jax.random.split(key, 13)
    ff = ff_hidden_mult * emb
    s_e = 1.0 / math.sqrt(emb)
    s_f = 1.0 / math.sqrt(ff)
    return {
        "wk": jax.random.normal(ks[0], (emb, emb), jnp.float32) * s_e,
        "wq": jax.random.normal(ks[1], (emb, emb), jnp.float32) * s_e,
        "wv": jax.random.normal(ks[2], (emb, emb), jnp.float32) * s_e,
        "wu": jax.random.normal(ks[3], (emb, emb), jnp.float32) * s_e,
        "bu": jax.random.normal(ks[4], (1, emb), jnp.float32) * 0.1,
        "g1": 1.0 + 0.1 * jax.random.normal(ks[5], (1, emb), jnp.float32),
        "beta1": 0.1 * jax.random.normal(ks[6], (1, emb), jnp.float32),
        "w1": jax.random.normal(ks[7], (emb, ff), jnp.float32) * s_e,
        "bf1": jax.random.normal(ks[8], (1, ff), jnp.float32) * 0.1,
        "w2": jax.random.normal(ks[9], (ff, emb), jnp.float32) * s_f,
        "bf2": jax.random.normal(ks[10], (1, emb), jnp.float32) * 0.1,
        "g2": 1.0 + 0.1 * jax.random.normal(ks[11], (1, emb), jnp.float32),
        "beta2": 0.1 * jax.random.normal(ks[12], (1, emb), jnp.float32),
    }


if __name__ == "__main__":
    B, S, E, H = 2, 16, 32, 8       # batch, seq, emb, num_heads (head_size = 4)
    SEQ_TILE = 8                    # 2 seq tiles per batch element -> exercises KV reuse
    key = jax.random.PRNGKey(0)
    kx, kp = jax.random.split(key)
    x = jax.random.normal(kx, (B, S, E), jnp.float32)
    params = make_params(kp, E)

    ok = True
    for mask in (False, True):
        out = jax.block_until_ready(
            transformer_block(x, params, num_heads=H, mask=mask, seq_tile=SEQ_TILE))
        err_mixed = float(jnp.max(jnp.abs(
            out - reference_mixed(x, params, num_heads=H, mask=mask))))
        err_f32 = float(jnp.max(jnp.abs(
            out - reference_f32(x, params, num_heads=H, mask=mask))))
        if not (err_mixed < 5e-3 and err_f32 < 1e-1):
            ok = False
            print(f"mismatch (mask={mask}): err_vs_mixed={err_mixed} err_vs_f32={err_f32}")
    if ok:
        print("KERNEL_OK")
</pallas_src>

<mosaic_0001>
module attributes {stable_mosaic.version = 11 : i64} {
  func.func @transformer_block_kernel(%arg0: i32, %arg1: i32, %arg2: memref<1x16x32xf32, #tpu.memory_space<vmem>>, %arg3: memref<32x32xbf16, #tpu.memory_space<vmem>>, %arg4: memref<32x32xbf16, #tpu.memory_space<vmem>>, %arg5: memref<32x32xbf16, #tpu.memory_space<vmem>>, %arg6: memref<32x32xbf16, #tpu.memory_space<vmem>>, %arg7: memref<32x128xbf16, #tpu.memory_space<vmem>>, %arg8: memref<128x32xbf16, #tpu.memory_space<vmem>>, %arg9: memref<6x32xf32, #tpu.memory_space<vmem>>, %arg10: memref<1x128xf32, #tpu.memory_space<vmem>>, %arg11: memref<1x8x32xf32, #tpu.memory_space<vmem>>, %arg12: memref<16x32xbf16, #tpu.memory_space<vmem>>, %arg13: memref<16x32xbf16, #tpu.memory_space<vmem>>, %arg14: memref<8x32xf32, #tpu.memory_space<vmem>>) attributes {dimension_semantics = [#tpu.dimension_semantics<parallel>, #tpu.dimension_semantics<arbitrary>], iteration_bounds = array<i64: 2, 2>, scalar_prefetch = 0 : i64, scratch_operands = 3 : i64, tpu.core_type = #tpu.core_type<tc>, window_params = [{transform_indices = @transform_0, window_bounds = array<i64: 1, 16, 32>}, {pipeline_mode = #tpu.pipeline_mode<synchronous>, transform_indices = @transform_1, window_bounds = array<i64: 32, 32>}, {pipeline_mode = #tpu.pipeline_mode<synchronous>, transform_indices = @transform_2, window_bounds = array<i64: 32, 32>}, {pipeline_mode = #tpu.pipeline_mode<synchronous>, transform_indices = @transform_3, window_bounds = array<i64: 32, 32>}, {pipeline_mode = #tpu.pipeline_mode<synchronous>, transform_indices = @transform_4, window_bounds = array<i64: 32, 32>}, {pipeline_mode = #tpu.pipeline_mode<synchronous>, transform_indices = @transform_5, window_bounds = array<i64: 32, 128>}, {pipeline_mode = #tpu.pipeline_mode<synchronous>, transform_indices = @transform_6, window_bounds = array<i64: 128, 32>}, {pipeline_mode = #tpu.pipeline_mode<synchronous>, transform_indices = @transform_7, window_bounds = array<i64: 6, 32>}, {pipeline_mode = #tpu.pipeline_mode<synchronous>, transform_indices = @transform_8, window_bounds = array<i64: 1, 128>}, {transform_indices = @transform_9, window_bounds = array<i64: 1, 8, 32>}]} {
    %c0_i32 = arith.constant 0 : i32
    %0 = arith.cmpi eq, %arg1, %c0_i32 : i32
    %1 = arith.extui %0 : i1 to i32
    %c0_i32_0 = arith.constant 0 : i32
    %2 = arith.cmpi ne, %1, %c0_i32_0 : i32
    scf.if %2 {
      %c0_79 = arith.constant 0 : index
      %c0_80 = arith.constant 0 : index
      %c0_81 = arith.constant 0 : index
      %227 = vector.load %arg2[%c0_79, %c0_80, %c0_81] : memref<1x16x32xf32, #tpu.memory_space<vmem>>, vector<1x16x32xf32>
      %228 = vector.shape_cast %227 : vector<1x16x32xf32> to vector<16x32xf32>
      %229 = arith.truncf %228 : vector<16x32xf32> to vector<16x32xbf16>
      %c0_82 = arith.constant 0 : index
      %c0_83 = arith.constant 0 : index
      %230 = vector.load %arg3[%c0_82, %c0_83] : memref<32x32xbf16, #tpu.memory_space<vmem>>, vector<32x32xbf16>
      %cst_84 = arith.constant dense<0.000000e+00> : vector<16x32xf32>
      %231 = tpu.matmul %229, %230, %cst_84 {dimension_numbers = #tpu.dot_dimension_numbers<[1], [0], [0], [1], [0, 0, 1, 1], [], []>} : vector<16x32xbf16>, vector<32x32xbf16>, vector<16x32xf32> -> vector<16x32xf32>
      %232 = arith.truncf %231 : vector<16x32xf32> to vector<16x32xbf16>
      %c0_85 = arith.constant 0 : index
      %c0_86 = arith.constant 0 : index
      %233 = vector.load %arg12[%c0_85, %c0_86] : memref<16x32xbf16, #tpu.memory_space<vmem>>, vector<16x32xbf16>
      tpu.vector_store %arg12[%c0_85, %c0_86], %232 {strides = array<i32>} : memref<16x32xbf16, #tpu.memory_space<vmem>>, vector<16x32xbf16>,
      %c0_87 = arith.constant 0 : index
      %c0_88 = arith.constant 0 : index
      %234 = vector.load %arg5[%c0_87, %c0_88] : memref<32x32xbf16, #tpu.memory_space<vmem>>, vector<32x32xbf16>
      %cst_89 = arith.constant dense<0.000000e+00> : vector<16x32xf32>
      %235 = tpu.matmul %229, %234, %cst_89 {dimension_numbers = #tpu.dot_dimension_numbers<[1], [0], [0], [1], [0, 0, 1, 1], [], []>} : vector<16x32xbf16>, vector<32x32xbf16>, vector<16x32xf32> -> vector<16x32xf32>
      %236 = arith.truncf %235 : vector<16x32xf32> to vector<16x32xbf16>
      %c0_90 = arith.constant 0 : index
      %c0_91 = arith.constant 0 : index
      %237 = vector.load %arg13[%c0_90, %c0_91] : memref<16x32xbf16, #tpu.memory_space<vmem>>, vector<16x32xbf16>
      tpu.vector_store %arg13[%c0_90, %c0_91], %236 {strides = array<i32>} : memref<16x32xbf16, #tpu.memory_space<vmem>>, vector<16x32xbf16>,
    } else {
    }
    %c8_i32 = arith.constant 8 : i32
    %3 = arith.muli %arg1, %c8_i32 : i32
    %4 = tpu.assume_multiple %3, 8 : i32
    %c0 = arith.constant 0 : index
    %5 = arith.index_cast %4 : i32 to index
    %c0_1 = arith.constant 0 : index
    %6 = vector.load %arg2[%c0, %5, %c0_1] : memref<1x16x32xf32, #tpu.memory_space<vmem>>, vector<1x8x32xf32>
    %7 = vector.shape_cast %6 : vector<1x8x32xf32> to vector<8x32xf32>
    %8 = arith.truncf %7 : vector<8x32xf32> to vector<8x32xbf16>
    %c0_2 = arith.constant 0 : index
    %c0_3 = arith.constant 0 : index
    %9 = vector.load %arg4[%c0_2, %c0_3] : memref<32x32xbf16, #tpu.memory_space<vmem>>, vector<32x32xbf16>
    %cst = arith.constant dense<0.000000e+00> : vector<8x32xf32>
    %10 = tpu.matmul %8, %9, %cst {dimension_numbers = #tpu.dot_dimension_numbers<[1], [0], [0], [1], [0, 0, 1, 1], [], []>} : vector<8x32xbf16>, vector<32x32xbf16>, vector<8x32xf32> -> vector<8x32xf32>
    %cst_4 = arith.constant 0.176776692 : f32
    %11 = vector.broadcast %cst_4 : f32 to vector<8x32xf32>
    %12 = arith.mulf %10, %11 : vector<8x32xf32>
    %13 = arith.truncf %12 : vector<8x32xf32> to vector<8x32xbf16>
    %c0_5 = arith.constant 0 : index
    %c0_6 = arith.constant 0 : index
    %14 = vector.load %arg12[%c0_5, %c0_6] : memref<16x32xbf16, #tpu.memory_space<vmem>>, vector<16x32xbf16>
    %c0_7 = arith.constant 0 : index
    %c0_8 = arith.constant 0 : index
    %15 = vector.load %arg13[%c0_7, %c0_8] : memref<16x32xbf16, #tpu.memory_space<vmem>>, vector<16x32xbf16>
    %16 = vector.extract_strided_slice %13 {offsets = [0, 0], sizes = [8, 4], strides = [1, 1]} : vector<8x32xbf16> to vector<8x4xbf16>
    %17 = vector.extract_strided_slice %14 {offsets = [0, 0], sizes = [16, 4], strides = [1, 1]} : vector<16x32xbf16> to vector<16x4xbf16>
    %cst_9 = arith.constant dense<0.000000e+00> : vector<8x16xf32>
    %18 = tpu.matmul %16, %17, %cst_9 {dimension_numbers = #tpu.dot_dimension_numbers<[1], [1], [0], [0], [0, 0, 1, 0], [], []>} : vector<8x4xbf16>, vector<16x4xbf16>, vector<8x16xf32> -> vector<8x16xf32>
    %cst_10 = arith.constant dense<0xFF800000> : vector<8xf32>
    %19 = vector.multi_reduction <maximumf>, %18, %cst_10 [1] : vector<8x16xf32> to vector<8xf32>
    %20 = vector.shape_cast %19 : vector<8xf32> to vector<8x1xf32>
    %21 = vector.broadcast %20 : vector<8x1xf32> to vector<8x16xf32>
    %22 = arith.subf %18, %21 : vector<8x16xf32>
    %23 = math.exp %22 : vector<8x16xf32>
    %cst_11 = arith.constant dense<0.000000e+00> : vector<8xf32>
    %24 = vector.multi_reduction <add>, %23, %cst_11 [1] : vector<8x16xf32> to vector<8xf32>
    %25 = vector.shape_cast %24 : vector<8xf32> to vector<8x1xf32>
    %26 = tpu.reciprocal %25 : vector<8x1xf32> -> vector<8x1xf32>
    %27 = vector.broadcast %26 : vector<8x1xf32> to vector<8x16xf32>
    %28 = arith.mulf %23, %27 : vector<8x16xf32>
    %29 = arith.truncf %28 : vector<8x16xf32> to vector<8x16xbf16>
    %30 = vector.extract_strided_slice %15 {offsets = [0, 0], sizes = [16, 4], strides = [1, 1]} : vector<16x32xbf16> to vector<16x4xbf16>
    %cst_12 = arith.constant dense<0.000000e+00> : vector<8x4xf32>
    %31 = tpu.matmul %29, %30, %cst_12 {dimension_numbers = #tpu.dot_dimension_numbers<[1], [0], [0], [1], [0, 0, 1, 1], [], []>} : vector<8x16xbf16>, vector<16x4xbf16>, vector<8x4xf32> -> vector<8x4xf32>
    %c0_13 = arith.constant 0 : index
    %c0_14 = arith.constant 0 : index
    %32 = vector.load %arg14[%c0_13, %c0_14] : memref<8x32xf32, #tpu.memory_space<vmem>>, vector<8x4xf32>
    tpu.vector_store %arg14[%c0_13, %c0_14], %31 {strides = array<i32>} : memref<8x32xf32, #tpu.memory_space<vmem>>, vector<8x4xf32>,
    %33 = vector.extract_strided_slice %13 {offsets = [0, 4], sizes = [8, 4], strides = [1, 1]} : vector<8x32xbf16> to vector<8x4xbf16>
    %34 = vector.extract_strided_slice %14 {offsets = [0, 4], sizes = [16, 4], strides = [1, 1]} : vector<16x32xbf16> to vector<16x4xbf16>
    %cst_15 = arith.constant dense<0.000000e+00> : vector<8x16xf32>
    %35 = tpu.matmul %33, %34, %cst_15 {dimension_numbers = #tpu.dot_dimension_numbers<[1], [1], [0], [0], [0, 0, 1, 0], [], []>} : vector<8x4xbf16>, vector<16x4xbf16>, vector<8x16xf32> -> vector<8x16xf32>
    %cst_16 = arith.constant dense<0xFF800000> : vector<8xf32>
    %36 = vector.multi_reduction <maximumf>, %35, %cst_16 [1] : vector<8x16xf32> to vector<8xf32>
    %37 = vector.shape_cast %36 : vector<8xf32> to vector<8x1xf32>
    %38 = vector.broadcast %37 : vector<8x1xf32> to vector<8x16xf32>
    %39 = arith.subf %35, %38 : vector<8x16xf32>
    %40 = math.exp %39 : vector<8x16xf32>
    %cst_17 = arith.constant dense<0.000000e+00> : vector<8xf32>
    %41 = vector.multi_reduction <add>, %40, %cst_17 [1] : vector<8x16xf32> to vector<8xf32>
    %42 = vector.shape_cast %41 : vector<8xf32> to vector<8x1xf32>
    %43 = tpu.reciprocal %42 : vector<8x1xf32> -> vector<8x1xf32>
    %44 = vector.broadcast %43 : vector<8x1xf32> to vector<8x16xf32>
    %45 = arith.mulf %40, %44 : vector<8x16xf32>
    %46 = arith.truncf %45 : vector<8x16xf32> to vector<8x16xbf16>
    %47 = vector.extract_strided_slice %15 {offsets = [0, 4], sizes = [16, 4], strides = [1, 1]} : vector<16x32xbf16> to vector<16x4xbf16>
    %cst_18 = arith.constant dense<0.000000e+00> : vector<8x4xf32>
    %48 = tpu.matmul %46, %47, %cst_18 {dimension_numbers = #tpu.dot_dimension_numbers<[1], [0], [0], [1], [0, 0, 1, 1], [], []>} : vector<8x16xbf16>, vector<16x4xbf16>, vector<8x4xf32> -> vector<8x4xf32>
    %c0_19 = arith.constant 0 : index
    %c4 = arith.constant 4 : index
    %49 = vector.load %arg14[%c0_19, %c4] : memref<8x32xf32, #tpu.memory_space<vmem>>, vector<8x4xf32>
    tpu.vector_store %arg14[%c0_19, %c4], %48 {strides = array<i32>} : memref<8x32xf32, #tpu.memory_space<vmem>>, vector<8x4xf32>,
    %50 = vector.extract_strided_slice %13 {offsets = [0, 8], sizes = [8, 4], strides = [1, 1]} : vector<8x32xbf16> to vector<8x4xbf16>
    %51 = vector.extract_strided_slice %14 {offsets = [0, 8], sizes = [16, 4], strides = [1, 1]} : vector<16x32xbf16> to vector<16x4xbf16>
    %cst_20 = arith.constant dense<0.000000e+00> : vector<8x16xf32>
    %52 = tpu.matmul %50, %51, %cst_20 {dimension_numbers = #tpu.dot_dimension_numbers<[1], [1], [0], [0], [0, 0, 1, 0], [], []>} : vector<8x4xbf16>, vector<16x4xbf16>, vector<8x16xf32> -> vector<8x16xf32>
    %cst_21 = arith.constant dense<0xFF800000> : vector<8xf32>
    %53 = vector.multi_reduction <maximumf>, %52, %cst_21 [1] : vector<8x16xf32> to vector<8xf32>
    %54 = vector.shape_cast %53 : vector<8xf32> to vector<8x1xf32>
    %55 = vector.broadcast %54 : vector<8x1xf32> to vector<8x16xf32>
    %56 = arith.subf %52, %55 : vector<8x16xf32>
    %57 = math.exp %56 : vector<8x16xf32>
    %cst_22 = arith.constant dense<0.000000e+00> : vector<8xf32>
    %58 = vector.multi_reduction <add>, %57, %cst_22 [1] : vector<8x16xf32> to vector<8xf32>
    %59 = vector.shape_cast %58 : vector<8xf32> to vector<8x1xf32>
    %60 = tpu.reciprocal %59 : vector<8x1xf32> -> vector<8x1xf32>
    %61 = vector.broadcast %60 : vector<8x1xf32> to vector<8x16xf32>
    %62 = arith.mulf %57, %61 : vector<8x16xf32>
    %63 = arith.truncf %62 : vector<8x16xf32> to vector<8x16xbf16>
    %64 = vector.extract_strided_slice %15 {offsets = [0, 8], sizes = [16, 4], strides = [1, 1]} : vector<16x32xbf16> to vector<16x4xbf16>
    %cst_23 = arith.constant dense<0.000000e+00> : vector<8x4xf32>
    %65 = tpu.matmul %63, %64, %cst_23 {dimension_numbers = #tpu.dot_dimension_numbers<[1], [0], [0], [1], [0, 0, 1, 1], [], []>} : vector<8x16xbf16>, vector<16x4xbf16>, vector<8x4xf32> -> vector<8x4xf32>
    %c0_24 = arith.constant 0 : index
    %c8 = arith.constant 8 : index
    %66 = vector.load %arg14[%c0_24, %c8] : memref<8x32xf32, #tpu.memory_space<vmem>>, vector<8x4xf32>
    tpu.vector_store %arg14[%c0_24, %c8], %65 {strides = array<i32>} : memref<8x32xf32, #tpu.memory_space<vmem>>, vector<8x4xf32>,
    %67 = vector.extract_strided_slice %13 {offsets = [0, 12], sizes = [8, 4], strides = [1, 1]} : vector<8x32xbf16> to vector<8x4xbf16>
    %68 = vector.extract_strided_slice %14 {offsets = [0, 12], sizes = [16, 4], strides = [1, 1]} : vector<16x32xbf16> to vector<16x4xbf16>
    %cst_25 = arith.constant dense<0.000000e+00> : vector<8x16xf32>
    %69 = tpu.matmul %67, %68, %cst_25 {dimension_numbers = #tpu.dot_dimension_numbers<[1], [1], [0], [0], [0, 0, 1, 0], [], []>} : vector<8x4xbf16>, vector<16x4xbf16>, vector<8x16xf32> -> vector<8x16xf32>
    %cst_26 = arith.constant dense<0xFF800000> : vector<8xf32>
    %70 = vector.multi_reduction <maximumf>, %69, %cst_26 [1] : vector<8x16xf32> to vector<8xf32>
    %71 = vector.shape_cast %70 : vector<8xf32> to vector<8x1xf32>
    %72 = vector.broadcast %71 : vector<8x1xf32> to vector<8x16xf32>
    %73 = arith.subf %69, %72 : vector<8x16xf32>
    %74 = math.exp %73 : vector<8x16xf32>
    %cst_27 = arith.constant dense<0.000000e+00> : vector<8xf32>
    %75 = vector.multi_reduction <add>, %74, %cst_27 [1] : vector<8x16xf32> to vector<8xf32>
    %76 = vector.shape_cast %75 : vector<8xf32> to vector<8x1xf32>
    %77 = tpu.reciprocal %76 : vector<8x1xf32> -> vector<8x1xf32>
    %78 = vector.broadcast %77 : vector<8x1xf32> to vector<8x16xf32>
    %79 = arith.mulf %74, %78 : vector<8x16xf32>
    %80 = arith.truncf %79 : vector<8x16xf32> to vector<8x16xbf16>
    %81 = vector.extract_strided_slice %15 {offsets = [0, 12], sizes = [16, 4], strides = [1, 1]} : vector<16x32xbf16> to vector<16x4xbf16>
    %cst_28 = arith.constant dense<0.000000e+00> : vector<8x4xf32>
    %82 = tpu.matmul %80, %81, %cst_28 {dimension_numbers = #tpu.dot_dimension_numbers<[1], [0], [0], [1], [0, 0, 1, 1], [], []>} : vector<8x16xbf16>, vector<16x4xbf16>, vector<8x4xf32> -> vector<8x4xf32>
    %c0_29 = arith.constant 0 : index
    %c12 = arith.constant 12 : index
    %83 = vector.load %arg14[%c0_29, %c12] : memref<8x32xf32, #tpu.memory_space<vmem>>, vector<8x4xf32>
    tpu.vector_store %arg14[%c0_29, %c12], %82 {strides = array<i32>} : memref<8x32xf32, #tpu.memory_space<vmem>>, vector<8x4xf32>,
    %84 = vector.extract_strided_slice %13 {offsets = [0, 16], sizes = [8, 4], strides = [1, 1]} : vector<8x32xbf16> to vector<8x4xbf16>
    %85 = vector.extract_strided_slice %14 {offsets = [0, 16], sizes = [16, 4], strides = [1, 1]} : vector<16x32xbf16> to vector<16x4xbf16>
    %cst_30 = arith.constant dense<0.000000e+00> : vector<8x16xf32>
    %86 = tpu.matmul %84, %85, %cst_30 {dimension_numbers = #tpu.dot_dimension_numbers<[1], [1], [0], [0], [0, 0, 1, 0], [], []>} : vector<8x4xbf16>, vector<16x4xbf16>, vector<8x16xf32> -> vector<8x16xf32>
    %cst_31 = arith.constant dense<0xFF800000> : vector<8xf32>
    %87 = vector.multi_reduction <maximumf>, %86, %cst_31 [1] : vector<8x16xf32> to vector<8xf32>
    %88 = vector.shape_cast %87 : vector<8xf32> to vector<8x1xf32>
    %89 = vector.broadcast %88 : vector<8x1xf32> to vector<8x16xf32>
    %90 = arith.subf %86, %89 : vector<8x16xf32>
    %91 = math.exp %90 : vector<8x16xf32>
    %cst_32 = arith.constant dense<0.000000e+00> : vector<8xf32>
    %92 = vector.multi_reduction <add>, %91, %cst_32 [1] : vector<8x16xf32> to vector<8xf32>
    %93 = vector.shape_cast %92 : vector<8xf32> to vector<8x1xf32>
    %94 = tpu.reciprocal %93 : vector<8x1xf32> -> vector<8x1xf32>
    %95 = vector.broadcast %94 : vector<8x1xf32> to vector<8x16xf32>
    %96 = arith.mulf %91, %95 : vector<8x16xf32>
    %97 = arith.truncf %96 : vector<8x16xf32> to vector<8x16xbf16>
    %98 = vector.extract_strided_slice %15 {offsets = [0, 16], sizes = [16, 4], strides = [1, 1]} : vector<16x32xbf16> to vector<16x4xbf16>
    %cst_33 = arith.constant dense<0.000000e+00> : vector<8x4xf32>
    %99 = tpu.matmul %97, %98, %cst_33 {dimension_numbers = #tpu.dot_dimension_numbers<[1], [0], [0], [1], [0, 0, 1, 1], [], []>} : vector<8x16xbf16>, vector<16x4xbf16>, vector<8x4xf32> -> vector<8x4xf32>
    %c0_34 = arith.constant 0 : index
    %c16 = arith.constant 16 : index
    %100 = vector.load %arg14[%c0_34, %c16] : memref<8x32xf32, #tpu.memory_space<vmem>>, vector<8x4xf32>
    tpu.vector_store %arg14[%c0_34, %c16], %99 {strides = array<i32>} : memref<8x32xf32, #tpu.memory_space<vmem>>, vector<8x4xf32>,
    %101 = vector.extract_strided_slice %13 {offsets = [0, 20], sizes = [8, 4], strides = [1, 1]} : vector<8x32xbf16> to vector<8x4xbf16>
    %102 = vector.extract_strided_slice %14 {offsets = [0, 20], sizes = [16, 4], strides = [1, 1]} : vector<16x32xbf16> to vector<16x4xbf16>
    %cst_35 = arith.constant dense<0.000000e+00> : vector<8x16xf32>
    %103 = tpu.matmul %101, %102, %cst_35 {dimension_numbers = #tpu.dot_dimension_numbers<[1], [1], [0], [0], [0, 0, 1, 0], [], []>} : vector<8x4xbf16>, vector<16x4xbf16>, vector<8x16xf32> -> vector<8x16xf32>
    %cst_36 = arith.constant dense<0xFF800000> : vector<8xf32>
    %104 = vector.multi_reduction <maximumf>, %103, %cst_36 [1] : vector<8x16xf32> to vector<8xf32>
    %105 = vector.shape_cast %104 : vector<8xf32> to vector<8x1xf32>
    %106 = vector.broadcast %105 : vector<8x1xf32> to vector<8x16xf32>
    %107 = arith.subf %103, %106 : vector<8x16xf32>
    %108 = math.exp %107 : vector<8x16xf32>
    %cst_37 = arith.constant dense<0.000000e+00> : vector<8xf32>
    %109 = vector.multi_reduction <add>, %108, %cst_37 [1] : vector<8x16xf32> to vector<8xf32>
    %110 = vector.shape_cast %109 : vector<8xf32> to vector<8x1xf32>
    %111 = tpu.reciprocal %110 : vector<8x1xf32> -> vector<8x1xf32>
    %112 = vector.broadcast %111 : vector<8x1xf32> to vector<8x16xf32>
    %113 = arith.mulf %108, %112 : vector<8x16xf32>
    %114 = arith.truncf %113 : vector<8x16xf32> to vector<8x16xbf16>
    %115 = vector.extract_strided_slice %15 {offsets = [0, 20], sizes = [16, 4], strides = [1, 1]} : vector<16x32xbf16> to vector<16x4xbf16>
    %cst_38 = arith.constant dense<0.000000e+00> : vector<8x4xf32>
    %116 = tpu.matmul %114, %115, %cst_38 {dimension_numbers = #tpu.dot_dimension_numbers<[1], [0], [0], [1], [0, 0, 1, 1], [], []>} : vector<8x16xbf16>, vector<16x4xbf16>, vector<8x4xf32> -> vector<8x4xf32>
    %c0_39 = arith.constant 0 : index
    %c20 = arith.constant 20 : index
    %117 = vector.load %arg14[%c0_39, %c20] : memref<8x32xf32, #tpu.memory_space<vmem>>, vector<8x4xf32>
    tpu.vector_store %arg14[%c0_39, %c20], %116 {strides = array<i32>} : memref<8x32xf32, #tpu.memory_space<vmem>>, vector<8x4xf32>,
    %118 = vector.extract_strided_slice %13 {offsets = [0, 24], sizes = [8, 4], strides = [1, 1]} : vector<8x32xbf16> to vector<8x4xbf16>
    %119 = vector.extract_strided_slice %14 {offsets = [0, 24], sizes = [16, 4], strides = [1, 1]} : vector<16x32xbf16> to vector<16x4xbf16>
    %cst_40 = arith.constant dense<0.000000e+00> : vector<8x16xf32>
    %120 = tpu.matmul %118, %119, %cst_40 {dimension_numbers = #tpu.dot_dimension_numbers<[1], [1], [0], [0], [0, 0, 1, 0], [], []>} : vector<8x4xbf16>, vector<16x4xbf16>, vector<8x16xf32> -> vector<8x16xf32>
    %cst_41 = arith.constant dense<0xFF800000> : vector<8xf32>
    %121 = vector.multi_reduction <maximumf>, %120, %cst_41 [1] : vector<8x16xf32> to vector<8xf32>
    %122 = vector.shape_cast %121 : vector<8xf32> to vector<8x1xf32>
    %123 = vector.broadcast %122 : vector<8x1xf32> to vector<8x16xf32>
    %124 = arith.subf %120, %123 : vector<8x16xf32>
    %125 = math.exp %124 : vector<8x16xf32>
    %cst_42 = arith.constant dense<0.000000e+00> : vector<8xf32>
    %126 = vector.multi_reduction <add>, %125, %cst_42 [1] : vector<8x16xf32> to vector<8xf32>
    %127 = vector.shape_cast %126 : vector<8xf32> to vector<8x1xf32>
    %128 = tpu.reciprocal %127 : vector<8x1xf32> -> vector<8x1xf32>
    %129 = vector.broadcast %128 : vector<8x1xf32> to vector<8x16xf32>
    %130 = arith.mulf %125, %129 : vector<8x16xf32>
    %131 = arith.truncf %130 : vector<8x16xf32> to vector<8x16xbf16>
    %132 = vector.extract_strided_slice %15 {offsets = [0, 24], sizes = [16, 4], strides = [1, 1]} : vector<16x32xbf16> to vector<16x4xbf16>
    %cst_43 = arith.constant dense<0.000000e+00> : vector<8x4xf32>
    %133 = tpu.matmul %131, %132, %cst_43 {dimension_numbers = #tpu.dot_dimension_numbers<[1], [0], [0], [1], [0, 0, 1, 1], [], []>} : vector<8x16xbf16>, vector<16x4xbf16>, vector<8x4xf32> -> vector<8x4xf32>
    %c0_44 = arith.constant 0 : index
    %c24 = arith.constant 24 : index
    %134 = vector.load %arg14[%c0_44, %c24] : memref<8x32xf32, #tpu.memory_space<vmem>>, vector<8x4xf32>
    tpu.vector_store %arg14[%c0_44, %c24], %133 {strides = array<i32>} : memref<8x32xf32, #tpu.memory_space<vmem>>, vector<8x4xf32>,
    %135 = vector.extract_strided_slice %13 {offsets = [0, 28], sizes = [8, 4], strides = [1, 1]} : vector<8x32xbf16> to vector<8x4xbf16>
    %136 = vector.extract_strided_slice %14 {offsets = [0, 28], sizes = [16, 4], strides = [1, 1]} : vector<16x32xbf16> to vector<16x4xbf16>
    %cst_45 = arith.constant dense<0.000000e+00> : vector<8x16xf32>
    %137 = tpu.matmul %135, %136, %cst_45 {dimension_numbers = #tpu.dot_dimension_numbers<[1], [1], [0], [0], [0, 0, 1, 0], [], []>} : vector<8x4xbf16>, vector<16x4xbf16>, vector<8x16xf32> -> vector<8x16xf32>
    %cst_46 = arith.constant dense<0xFF800000> : vector<8xf32>
    %138 = vector.multi_reduction <maximumf>, %137, %cst_46 [1] : vector<8x16xf32> to vector<8xf32>
    %139 = vector.shape_cast %138 : vector<8xf32> to vector<8x1xf32>
    %140 = vector.broadcast %139 : vector<8x1xf32> to vector<8x16xf32>
    %141 = arith.subf %137, %140 : vector<8x16xf32>
    %142 = math.exp %141 : vector<8x16xf32>
    %cst_47 = arith.constant dense<0.000000e+00> : vector<8xf32>
    %143 = vector.multi_reduction <add>, %142, %cst_47 [1] : vector<8x16xf32> to vector<8xf32>
    %144 = vector.shape_cast %143 : vector<8xf32> to vector<8x1xf32>
    %145 = tpu.reciprocal %144 : vector<8x1xf32> -> vector<8x1xf32>
    %146 = vector.broadcast %145 : vector<8x1xf32> to vector<8x16xf32>
    %147 = arith.mulf %142, %146 : vector<8x16xf32>
    %148 = arith.truncf %147 : vector<8x16xf32> to vector<8x16xbf16>
    %149 = vector.extract_strided_slice %15 {offsets = [0, 28], sizes = [16, 4], strides = [1, 1]} : vector<16x32xbf16> to vector<16x4xbf16>
    %cst_48 = arith.constant dense<0.000000e+00> : vector<8x4xf32>
    %150 = tpu.matmul %148, %149, %cst_48 {dimension_numbers = #tpu.dot_dimension_numbers<[1], [0], [0], [1], [0, 0, 1, 1], [], []>} : vector<8x16xbf16>, vector<16x4xbf16>, vector<8x4xf32> -> vector<8x4xf32>
    %c0_49 = arith.constant 0 : index
    %c28 = arith.constant 28 : index
    %151 = vector.load %arg14[%c0_49, %c28] : memref<8x32xf32, #tpu.memory_space<vmem>>, vector<8x4xf32>
    tpu.vector_store %arg14[%c0_49, %c28], %150 {strides = array<i32>} : memref<8x32xf32, #tpu.memory_space<vmem>>, vector<8x4xf32>,
    %c0_50 = arith.constant 0 : index
    %c0_51 = arith.constant 0 : index
    %152 = vector.load %arg9[%c0_50, %c0_51] : memref<6x32xf32, #tpu.memory_space<vmem>>, vector<6x32xf32>
    %153 = vector.extract_strided_slice %152 {offsets = [0, 0], sizes = [1, 32], strides = [1, 1]} : vector<6x32xf32> to vector<1x32xf32>
    %154 = vector.extract_strided_slice %152 {offsets = [1, 0], sizes = [1, 32], strides = [1, 1]} : vector<6x32xf32> to vector<1x32xf32>
    %155 = vector.extract_strided_slice %152 {offsets = [2, 0], sizes = [1, 32], strides = [1, 1]} : vector<6x32xf32> to vector<1x32xf32>
    %156 = vector.extract_strided_slice %152 {offsets = [3, 0], sizes = [1, 32], strides = [1, 1]} : vector<6x32xf32> to vector<1x32xf32>
    %157 = vector.extract_strided_slice %152 {offsets = [4, 0], sizes = [1, 32], strides = [1, 1]} : vector<6x32xf32> to vector<1x32xf32>
    %158 = vector.extract_strided_slice %152 {offsets = [5, 0], sizes = [1, 32], strides = [1, 1]} : vector<6x32xf32> to vector<1x32xf32>
    %c0_52 = arith.constant 0 : index
    %c0_53 = arith.constant 0 : index
    %159 = vector.load %arg14[%c0_52, %c0_53] : memref<8x32xf32, #tpu.memory_space<vmem>>, vector<8x32xf32>
    %160 = arith.truncf %159 : vector<8x32xf32> to vector<8x32xbf16>
    %c0_54 = arith.constant 0 : index
    %c0_55 = arith.constant 0 : index
    %161 = vector.load %arg6[%c0_54, %c0_55] : memref<32x32xbf16, #tpu.memory_space<vmem>>, vector<32x32xbf16>
    %cst_56 = arith.constant dense<0.000000e+00> : vector<8x32xf32>
    %162 = tpu.matmul %160, %161, %cst_56 {dimension_numbers = #tpu.dot_dimension_numbers<[1], [0], [0], [1], [0, 0, 1, 1], [], []>} : vector<8x32xbf16>, vector<32x32xbf16>, vector<8x32xf32> -> vector<8x32xf32>
    %163 = vector.broadcast %153 : vector<1x32xf32> to vector<8x32xf32>
    %164 = arith.addf %162, %163 : vector<8x32xf32>
    %165 = arith.addf %7, %164 : vector<8x32xf32>
    %cst_57 = arith.constant dense<0.000000e+00> : vector<8xf32>
    %166 = vector.multi_reduction <add>, %165, %cst_57 [1] : vector<8x32xf32> to vector<8xf32>
    %167 = vector.shape_cast %166 : vector<8xf32> to vector<8x1xf32>
    %cst_58 = arith.constant 3.200000e+01 : f32
    %168 = vector.broadcast %cst_58 : f32 to vector<8x1xf32>
    %169 = arith.divf %167, %168 : vector<8x1xf32>
    %170 = vector.broadcast %169 : vector<8x1xf32> to vector<8x32xf32>
    %171 = arith.subf %165, %170 : vector<8x32xf32>
    %172 = arith.mulf %171, %171 : vector<8x32xf32>
    %cst_59 = arith.constant dense<0.000000e+00> : vector<8xf32>
    %173 = vector.multi_reduction <add>, %172, %cst_59 [1] : vector<8x32xf32> to vector<8xf32>
    %174 = vector.shape_cast %173 : vector<8xf32> to vector<8x1xf32>
    %cst_60 = arith.constant 3.200000e+01 : f32
    %175 = vector.broadcast %cst_60 : f32 to vector<8x1xf32>
    %176 = arith.divf %174, %175 : vector<8x1xf32>
    %177 = vector.broadcast %169 : vector<8x1xf32> to vector<8x32xf32>
    %178 = arith.subf %165, %177 : vector<8x32xf32>
    %cst_61 = arith.constant 9.99999974E-6 : f32
    %179 = vector.broadcast %cst_61 : f32 to vector<8x1xf32>
    %180 = arith.addf %176, %179 : vector<8x1xf32>
    %181 = math.rsqrt %180 : vector<8x1xf32>
    %182 = vector.broadcast %181 : vector<8x1xf32> to vector<8x32xf32>
    %183 = arith.mulf %178, %182 : vector<8x32xf32>
    %184 = vector.broadcast %154 : vector<1x32xf32> to vector<8x32xf32>
    %185 = arith.mulf %183, %184 : vector<8x32xf32>
    %186 = vector.broadcast %155 : vector<1x32xf32> to vector<8x32xf32>
    %187 = arith.addf %185, %186 : vector<8x32xf32>
    %188 = arith.truncf %187 : vector<8x32xf32> to vector<8x32xbf16>
    %c0_62 = arith.constant 0 : index
    %c0_63 = arith.constant 0 : index
    %189 = vector.load %arg7[%c0_62, %c0_63] : memref<32x128xbf16, #tpu.memory_space<vmem>>, vector<32x128xbf16>
    %cst_64 = arith.constant dense<0.000000e+00> : vector<8x128xf32>
    %190 = tpu.matmul %188, %189, %cst_64 {dimension_numbers = #tpu.dot_dimension_numbers<[1], [0], [0], [1], [0, 0, 1, 1], [], []>} : vector<8x32xbf16>, vector<32x128xbf16>, vector<8x128xf32> -> vector<8x128xf32>
    %c0_65 = arith.constant 0 : index
    %c0_66 = arith.constant 0 : index
    %191 = vector.load %arg10[%c0_65, %c0_66] : memref<1x128xf32, #tpu.memory_space<vmem>>, vector<1x128xf32>
    %192 = vector.broadcast %191 : vector<1x128xf32> to vector<8x128xf32>
    %193 = arith.addf %190, %192 : vector<8x128xf32>
    %cst_67 = arith.constant 0.000000e+00 : f32
    %194 = vector.broadcast %cst_67 : f32 to vector<8x128xf32>
    %195 = arith.maximumf %193, %194 : vector<8x128xf32>
    %196 = arith.truncf %195 : vector<8x128xf32> to vector<8x128xbf16>
    %c0_68 = arith.constant 0 : index
    %c0_69 = arith.constant 0 : index
    %197 = vector.load %arg8[%c0_68, %c0_69] : memref<128x32xbf16, #tpu.memory_space<vmem>>, vector<128x32xbf16>
    %cst_70 = arith.constant dense<0.000000e+00> : vector<8x32xf32>
    %198 = tpu.matmul %196, %197, %cst_70 {dimension_numbers = #tpu.dot_dimension_numbers<[1], [0], [0], [1], [0, 0, 1, 1], [], []>} : vector<8x128xbf16>, vector<128x32xbf16>, vector<8x32xf32> -> vector<8x32xf32>
    %199 = vector.broadcast %156 : vector<1x32xf32> to vector<8x32xf32>
    %200 = arith.addf %198, %199 : vector<8x32xf32>
    %201 = arith.addf %200, %187 : vector<8x32xf32>
    %cst_71 = arith.constant dense<0.000000e+00> : vector<8xf32>
    %202 = vector.multi_reduction <add>, %201, %cst_71 [1] : vector<8x32xf32> to vector<8xf32>
    %203 = vector.shape_cast %202 : vector<8xf32> to vector<8x1xf32>
    %cst_72 = arith.constant 3.200000e+01 : f32
    %204 = vector.broadcast %cst_72 : f32 to vector<8x1xf32>
    %205 = arith.divf %203, %204 : vector<8x1xf32>
    %206 = vector.broadcast %205 : vector<8x1xf32> to vector<8x32xf32>
    %207 = arith.subf %201, %206 : vector<8x32xf32>
    %208 = arith.mulf %207, %207 : vector<8x32xf32>
    %cst_73 = arith.constant dense<0.000000e+00> : vector<8xf32>
    %209 = vector.multi_reduction <add>, %208, %cst_73 [1] : vector<8x32xf32> to vector<8xf32>
    %210 = vector.shape_cast %209 : vector<8xf32> to vector<8x1xf32>
    %cst_74 = arith.constant 3.200000e+01 : f32
    %211 = vector.broadcast %cst_74 : f32 to vector<8x1xf32>
    %212 = arith.divf %210, %211 : vector<8x1xf32>
    %213 = vector.broadcast %205 : vector<8x1xf32> to vector<8x32xf32>
    %214 = arith.subf %201, %213 : vector<8x32xf32>
    %cst_75 = arith.constant 9.99999974E-6 : f32
    %215 = vector.broadcast %cst_75 : f32 to vector<8x1xf32>
    %216 = arith.addf %212, %215 : vector<8x1xf32>
    %217 = math.rsqrt %216 : vector<8x1xf32>
    %218 = vector.broadcast %217 : vector<8x1xf32> to vector<8x32xf32>
    %219 = arith.mulf %214, %218 : vector<8x32xf32>
    %220 = vector.broadcast %157 : vector<1x32xf32> to vector<8x32xf32>
    %221 = arith.mulf %219, %220 : vector<8x32xf32>
    %222 = vector.broadcast %158 : vector<1x32xf32> to vector<8x32xf32>
    %223 = arith.addf %221, %222 : vector<8x32xf32>
    %c0_76 = arith.constant 0 : index
    %c0_77 = arith.constant 0 : index
    %c0_78 = arith.constant 0 : index
    %224 = vector.load %arg11[%c0_76, %c0_77, %c0_78] : memref<1x8x32xf32, #tpu.memory_space<vmem>>, vector<1x8x32xf32>
    %225 = vector.shape_cast %224 : vector<1x8x32xf32> to vector<8x32xf32>
    %226 = vector.shape_cast %223 : vector<8x32xf32> to vector<1x8x32xf32>
    tpu.vector_store %arg11[%c0_76, %c0_77, %c0_78], %226 {strides = array<i32>} : memref<1x8x32xf32, #tpu.memory_space<vmem>>, vector<1x8x32xf32>,
    return
  }
  func.func @transform_0(%arg0: i32, %arg1: i32) -> (i32, i32, i32) {
    %c0_i32 = arith.constant 0 : i32
    %c0_i32_0 = arith.constant 0 : i32
    %c0_i32_1 = arith.constant 0 : i32
    return %arg0, %c0_i32, %c0_i32_0 : i32, i32, i32
  }
  func.func @transform_1(%arg0: i32, %arg1: i32) -> (i32, i32) {
    %c0_i32 = arith.constant 0 : i32
    %c0_i32_0 = arith.constant 0 : i32
    %c0_i32_1 = arith.constant 0 : i32
    return %c0_i32, %c0_i32_0 : i32, i32
  }
  func.func @transform_2(%arg0: i32, %arg1: i32) -> (i32, i32) {
    %c0_i32 = arith.constant 0 : i32
    %c0_i32_0 = arith.constant 0 : i32
    %c0_i32_1 = arith.constant 0 : i32
    return %c0_i32, %c0_i32_0 : i32, i32
  }
  func.func @transform_3(%arg0: i32, %arg1: i32) -> (i32, i32) {
    %c0_i32 = arith.constant 0 : i32
    %c0_i32_0 = arith.constant 0 : i32
    %c0_i32_1 = arith.constant 0 : i32
    return %c0_i32, %c0_i32_0 : i32, i32
  }
  func.func @transform_4(%arg0: i32, %arg1: i32) -> (i32, i32) {
    %c0_i32 = arith.constant 0 : i32
    %c0_i32_0 = arith.constant 0 : i32
    %c0_i32_1 = arith.constant 0 : i32
    return %c0_i32, %c0_i32_0 : i32, i32
  }
  func.func @transform_5(%arg0: i32, %arg1: i32) -> (i32, i32) {
    %c0_i32 = arith.constant 0 : i32
    %c0_i32_0 = arith.constant 0 : i32
    %c0_i32_1 = arith.constant 0 : i32
    return %c0_i32, %c0_i32_0 : i32, i32
  }
  func.func @transform_6(%arg0: i32, %arg1: i32) -> (i32, i32) {
    %c0_i32 = arith.constant 0 : i32
    %c0_i32_0 = arith.constant 0 : i32
    %c0_i32_1 = arith.constant 0 : i32
    return %c0_i32, %c0_i32_0 : i32, i32
  }
  func.func @transform_7(%arg0: i32, %arg1: i32) -> (i32, i32) {
    %c0_i32 = arith.constant 0 : i32
    %c0_i32_0 = arith.constant 0 : i32
    %c0_i32_1 = arith.constant 0 : i32
    return %c0_i32, %c0_i32_0 : i32, i32
  }
  func.func @transform_8(%arg0: i32, %arg1: i32) -> (i32, i32) {
    %c0_i32 = arith.constant 0 : i32
    %c0_i32_0 = arith.constant 0 : i32
    %c0_i32_1 = arith.constant 0 : i32
    return %c0_i32, %c0_i32_0 : i32, i32
  }
  func.func @transform_9(%arg0: i32, %arg1: i32) -> (i32, i32, i32) {
    %c0_i32 = arith.constant 0 : i32
    %c0_i32_0 = arith.constant 0 : i32
    return %arg0, %arg1, %c0_i32 : i32, i32, i32
  }
}

</mosaic_0001>

<llo_original>
// kernel: tpu_custom_call.1
$region0: #{tpu_custom_call.1}
  #allocation0 [shape = 'u32[]', space=smem, size = 0x4, offset = 0x4, fixed_abs, tag = 'smem constant byte address 0x4 - core index']
  #allocation1 [shape = 'u32[72,128]{1,0:T(1,128)}', space=vmem, size = 0x9000, scoped, tag = 'internal scratch']
  #allocation2 [shape = 'bf16[16,32]{1,0:T(8,128)(2,1)}', space=vmem, size = 0x1000, scoped, tag = 'scratch operand']
  #allocation3 [shape = 'bf16[16,32]{1,0:T(8,128)(2,1)}', space=vmem, size = 0x1000, scoped, tag = 'scratch operand']
  #allocation4 [shape = 'f32[8,32]{1,0:T(8,128)}', space=vmem, size = 0x1000, scoped, tag = 'scratch operand']
  %s0 = inlined_call_operand.vmem [shape: f32[2,16,32], index: 0, kind: input, shape index: {}]
  %s1 = inlined_call_operand.vmem [shape: bf16[32,32], index: 1, kind: input, shape index: {}]
  %s2 = inlined_call_operand.vmem [shape: bf16[32,32], index: 2, kind: input, shape index: {}]
  %s3 = inlined_call_operand.vmem [shape: bf16[32,32], index: 3, kind: input, shape index: {}]
  %s4 = inlined_call_operand.hbm [shape: bf16[32,32], index: 4, kind: input, shape index: {}]
  %s5 = inlined_call_operand.hbm [shape: bf16[32,128], index: 5, kind: input, shape index: {}]
  %s6 = inlined_call_operand.vmem [shape: bf16[128,32], index: 6, kind: input, shape index: {}]
  %s7 = inlined_call_operand.hbm [shape: f32[6,32], index: 7, kind: input, shape index: {}]
  %s8 = inlined_call_operand.vmem [shape: f32[1,128], index: 8, kind: input, shape index: {}]
  %s9 = inlined_call_operand.hbm [shape: f32[2,16,32], index: 9, kind: output, shape index: {}]
  %s10 = sld [smem:[#allocation0]]
  $region85: #{tpu_custom_call.1} parent=0
    _
  %s12 = ssub.s32 1, %s10
  %s13 = scalar_select 0, %s12, %s10
  $region1: #{tpu_custom_call.1} parent=0
    #allocation5 [shape = 'u8[8192]{0}', space=vmem, size = 0x2000, scoped, tag = 'input window, operand 4, single buffered']
    #allocation6 [shape = 's32[2]{0}', space=sflag, size = 0x8, scoped, tag = 'scoped memory for tpu_custom_call.1']
    #allocation7 [shape = 's32[2]{0}', space=sflag, size = 0x8, scoped, tag = 'scoped memory for tpu_custom_call.1']
    #allocation8 [shape = 'u8[8192]{0}', space=vmem, size = 0x2000, scoped, tag = 'input window, operand 5, single buffered']
    #allocation9 [shape = 's32[1]{0}', space=sflag, size = 0x4, scoped, tag = 'scoped memory for tpu_custom_call.1']
    #allocation10 [shape = 'u8[4096]{0}', space=vmem, size = 0x1000, scoped, tag = 'input window, operand 7, single buffered']
    #allocation11 [shape = 'u8[8192]{0}', space=vmem, size = 0x2000, scoped, tag = 'output window, operand 0']
    %14 = vsyncpa [#allocation6], 0
    %15 = vsyncpa [#allocation9], 0
    %16 = vsyncpa [#allocation7], 0
    %s17 = scalar_lea.sflag [#allocation7], 1
    %18 = vsyncpa %s17, 0
    loop: start=0, step=1, limit=6
    $region2: #{tpu_custom_call.1} parent=1 // loop_pre_header
      _
    $region3: #{tpu_custom_call.1} parent=1 // loop_header
      %s20 = sphi 0, %s24
      %p21 = scmp.ge.s32.totalorder %s20, 6
      %s27 = sphi 0, %s39
      %s28 = sphi 0, %s35
      %s29 = sphi 0, %s27
      %s30 = sphi 0, %s28
      %s31 = sphi 0, %s29
      %s32 = sphi 0, %s30
      %s42 = sphi 0, %s44
      %s45 = sphi 0, %s42
      %s46 = sphi 0, %s45
      %s62 = sphi 0, %s46
      %s66 = sphi 0, %s66
      %s68 = sphi 0, %s66
      %s69 = sphi 0, %s68
      %s83 = sphi 0, %s69
      %s87 = sphi 0, %s87
      %s89 = sphi 0, %s87
      %s90 = sphi 0, %s89
      %s104 = sphi 0, %s90
      %s108 = sphi 0, %s108
      %s110 = sphi 0, %s108
      %s111 = sphi 0, %s110
      %s125 = sphi 0, %s111
      %s129 = sphi 0, %s129
      %s131 = sphi 0, %s129
      %s132 = sphi 0, %s131
      %s146 = sphi 0, %s132
      %s150 = sphi 0, %s150
      %s152 = sphi 0, %s150
      %s153 = sphi 0, %s152
      %s167 = sphi 0, %s153
      %s171 = sphi 0, %s171
      %s173 = sphi 0, %s171
      %s174 = sphi 0, %s173
      %s188 = sphi 0, %s174
      %s192 = sphi 0, %s192
      %s194 = sphi 0, %s192
      %s195 = sphi 0, %s194
      %s209 = sphi 0, %s195
      %s213 = sphi 0, %s213
      %s215 = sphi 0, %s213
      %s216 = sphi 0, %s215
      %s230 = sphi 0, %s216
      %s238 = sphi 0, %s240
      %s241 = sphi 0, %s238
      %s242 = sphi 0, %s241
      %s258 = sphi 0, %s242
    $region4: #{tpu_custom_call.1} parent=1 // loop_header_branch
      %23 = sbr.rel (%p21) target = $region8
    $region5: #{tpu_custom_call.1} parent=1 // loop_body
      %s25 = ssub.s32 %s20, 1
      %s26 = ssub.s32 %s20, 2
      %s33 = sadd.s32 1, %s28
      %p34 = scmp.ge.s32.totalorder %s33, 2
      %s35 = scalar_select %p34, 0, %s33
      %s36 = sadd.s32 1, %s27
      %s37 = scalar_select %p34, %s36, %s27
      %p38 = scmp.ge.s32.totalorder %s37, 2
      %s39 = scalar_select %p38, 0, %s37
      %s40 = ssub.s32 %s27, %s39
      %p41 = scmp.eq.s32.totalorder %s40, 0
      %s43 = sadd.s32 %s42, 1
      %s44 = scalar_select %p41, %s42, %s43
      %p47 = pneg %p41
      %p48 = scmp.eq.s32.totalorder %s20, 3
      %p49 = por %p47, %p48
      %p50 = scmp.ne.s32.totalorder %s42, %s45
      %p51 = scmp.eq.s32.totalorder %s20, 0
      %p52 = por %p50, %p51
      %p53 = scmp.ne.s32.totalorder %s42, %s45
      %p54 = scmp.eq.s32.totalorder %s25, 3
      %p55 = por %p53, %p54
      %p56 = scmp.ne.s32.totalorder %s45, %s46
      %p57 = scmp.eq.s32.totalorder %s25, 0
      %p58 = por %p56, %p57
      %p59 = scmp.ne.s32.totalorder %s45, %s46
      %p60 = scmp.eq.s32.totalorder %s26, 3
      %p61 = por %p59, %p60
      %p63 = scmp.ne.s32.totalorder %s46, %s62
      %p64 = scmp.eq.s32.totalorder %s26, 0
      %p65 = por %p63, %p64
      %s67 = sadd.s32 %s66, 1
      %p70 = scmp.eq.s32.totalorder %s20, 3
      %p71 = scmp.ne.s32.totalorder %s66, %s68
      %p72 = scmp.eq.s32.totalorder %s20, 0
      %p73 = por %p71, %p72
      %p74 = scmp.ne.s32.totalorder %s66, %s68
      %p75 = scmp.eq.s32.totalorder %s25, 3
      %p76 = por %p74, %p75
      %p77 = scmp.ne.s32.totalorder %s68, %s69
      %p78 = scmp.eq.s32.totalorder %s25, 0
      %p79 = por %p77, %p78
      %p80 = scmp.ne.s32.totalorder %s68, %s69
      %p81 = scmp.eq.s32.totalorder %s26, 3
      %p82 = por %p80, %p81
      %p84 = scmp.ne.s32.totalorder %s69, %s83
      %p85 = scmp.eq.s32.totalorder %s26, 0
      %p86 = por %p84, %p85
      %s88 = sadd.s32 %s87, 1
      %p91 = scmp.eq.s32.totalorder %s20, 3
      %p92 = scmp.ne.s32.totalorder %s87, %s89
      %p93 = scmp.eq.s32.totalorder %s20, 0
      %p94 = por %p92, %p93
      %p95 = scmp.ne.s32.totalorder %s87, %s89
      %p96 = scmp.eq.s32.totalorder %s25, 3
      %p97 = por %p95, %p96
      %p98 = scmp.ne.s32.totalorder %s89, %s90
      %p99 = scmp.eq.s32.totalorder %s25, 0
      %p100 = por %p98, %p99
      %p101 = scmp.ne.s32.totalorder %s89, %s90
      %p102 = scmp.eq.s32.totalorder %s26, 3
      %p103 = por %p101, %p102
      %p105 = scmp.ne.s32.totalorder %s90, %s104
      %p106 = scmp.eq.s32.totalorder %s26, 0
      %p107 = por %p105, %p106
      %s109 = sadd.s32 %s108, 1
      %p112 = scmp.eq.s32.totalorder %s20, 3
      %p113 = scmp.ne.s32.totalorder %s108, %s110
      %p114 = scmp.eq.s32.totalorder %s20, 0
      %p115 = por %p113, %p114
      %p116 = scmp.ne.s32.totalorder %s108, %s110
      %p117 = scmp.eq.s32.totalorder %s25, 3
      %p118 = por %p116, %p117
      %p119 = scmp.ne.s32.totalorder %s110, %s111
      %p120 = scmp.eq.s32.totalorder %s25, 0
      %p121 = por %p119, %p120
      %p122 = scmp.ne.s32.totalorder %s110, %s111
      %p123 = scmp.eq.s32.totalorder %s26, 3
      %p124 = por %p122, %p123
      %p126 = scmp.ne.s32.totalorder %s111, %s125
      %p127 = scmp.eq.s32.totalorder %s26, 0
      %p128 = por %p126, %p127
      %s130 = sadd.s32 %s129, 1
      %p133 = scmp.eq.s32.totalorder %s20, 3
      %p134 = scmp.ne.s32.totalorder %s129, %s131
      %p135 = scmp.eq.s32.totalorder %s20, 0
      %p136 = por %p134, %p135
      %p137 = scmp.ne.s32.totalorder %s129, %s131
      %p138 = scmp.eq.s32.totalorder %s25, 3
      %p139 = por %p137, %p138
      %p140 = scmp.ne.s32.totalorder %s131, %s132
      %p141 = scmp.eq.s32.totalorder %s25, 0
      %p142 = por %p140, %p141
      %p143 = scmp.ne.s32.totalorder %s131, %s132
      %p144 = scmp.eq.s32.totalorder %s26, 3
      %p145 = por %p143, %p144
      %p147 = scmp.ne.s32.totalorder %s132, %s146
      %p148 = scmp.eq.s32.totalorder %s26, 0
      %p149 = por %p147, %p148
      %s151 = sadd.s32 %s150, 1
      %p154 = scmp.eq.s32.totalorder %s20, 3
      %p155 = scmp.ne.s32.totalorder %s150, %s152
      %p156 = scmp.eq.s32.totalorder %s20, 0
      %p157 = por %p155, %p156
      %p158 = scmp.ne.s32.totalorder %s150, %s152
      %p159 = scmp.eq.s32.totalorder %s25, 3
      %p160 = por %p158, %p159
      %p161 = scmp.ne.s32.totalorder %s152, %s153
      %p162 = scmp.eq.s32.totalorder %s25, 0
      %p163 = por %p161, %p162
      %p164 = scmp.ne.s32.totalorder %s152, %s153
      %p165 = scmp.eq.s32.totalorder %s26, 3
      %p166 = por %p164, %p165
      %p168 = scmp.ne.s32.totalorder %s153, %s167
      %p169 = scmp.eq.s32.totalorder %s26, 0
      %p170 = por %p168, %p169
      %s172 = sadd.s32 %s171, 1
      %p175 = scmp.eq.s32.totalorder %s20, 3
      %p176 = scmp.ne.s32.totalorder %s171, %s173
      %p177 = scmp.eq.s32.totalorder %s20, 0
      %p178 = por %p176, %p177
      %p179 = scmp.ne.s32.totalorder %s171, %s173
      %p180 = scmp.eq.s32.totalorder %s25, 3
      %p181 = por %p179, %p180
      %p182 = scmp.ne.s32.totalorder %s173, %s174
      %p183 = scmp.eq.s32.totalorder %s25, 0
      %p184 = por %p182, %p183
      %p185 = scmp.ne.s32.totalorder %s173, %s174
      %p186 = scmp.eq.s32.totalorder %s26, 3
      %p187 = por %p185, %p186
      %p189 = scmp.ne.s32.totalorder %s174, %s188
      %p190 = scmp.eq.s32.totalorder %s26, 0
      %p191 = por %p189, %p190
      %s193 = sadd.s32 %s192, 1
      %p196 = scmp.eq.s32.totalorder %s20, 3
      %p197 = scmp.ne.s32.totalorder %s192, %s194
      %p198 = scmp.eq.s32.totalorder %s20, 0
      %p199 = por %p197, %p198
      %p200 = scmp.ne.s32.totalorder %s192, %s194
      %p201 = scmp.eq.s32.totalorder %s25, 3
      %p202 = por %p200, %p201
      %p203 = scmp.ne.s32.totalorder %s194, %s195
      %p204 = scmp.eq.s32.totalorder %s25, 0
      %p205 = por %p203, %p204
      %p206 = scmp.ne.s32.totalorder %s194, %s195
      %p207 = scmp.eq.s32.totalorder %s26, 3
      %p208 = por %p206, %p207
      %p210 = scmp.ne.s32.totalorder %s195, %s209
      %p211 = scmp.eq.s32.totalorder %s26, 0
      %p212 = por %p210, %p211
      %s214 = sadd.s32 %s213, 1
      %p217 = scmp.eq.s32.totalorder %s20, 3
      %p218 = scmp.ne.s32.totalorder %s213, %s215
      %p219 = scmp.eq.s32.totalorder %s20, 0
      %p220 = por %p218, %p219
      %p221 = scmp.ne.s32.totalorder %s213, %s215
      %p222 = scmp.eq.s32.totalorder %s25, 3
      %p223 = por %p221, %p222
      %p224 = scmp.ne.s32.totalorder %s215, %s216
      %p225 = scmp.eq.s32.totalorder %s25, 0
      %p226 = por %p224, %p225
      %p227 = scmp.ne.s32.totalorder %s215, %s216
      %p228 = scmp.eq.s32.totalorder %s26, 3
      %p229 = por %p227, %p228
      %p231 = scmp.ne.s32.totalorder %s216, %s230
      %p232 = scmp.eq.s32.totalorder %s26, 0
      %p233 = por %p231, %p232
      %s234 = ssub.s32 %s27, %s39
      %s235 = ssub.s32 %s28, %s35
      %s236 = sor.u32 %s234, %s235
      %p237 = scmp.eq.s32.totalorder %s236, 0
      %s239 = sadd.s32 %s238, 1
      %s240 = scalar_select %p237, %s238, %s239
      %p243 = pneg %p237
      %p244 = scmp.eq.s32.totalorder %s20, 3
      %p245 = por %p243, %p244
      %p246 = scmp.ne.s32.totalorder %s238, %s241
      %p247 = scmp.eq.s32.totalorder %s20, 0
      %p248 = por %p246, %p247
      %p249 = scmp.ne.s32.totalorder %s238, %s241
      %p250 = scmp.eq.s32.totalorder %s25, 3
      %p251 = por %p249, %p250
      %p252 = scmp.ne.s32.totalorder %s241, %s242
      %p253 = scmp.eq.s32.totalorder %s25, 0
      %p254 = por %p252, %p253
      %p255 = scmp.ne.s32.totalorder %s241, %s242
      %p256 = scmp.eq.s32.totalorder %s26, 3
      %p257 = por %p255, %p256
      %p259 = scmp.ne.s32.totalorder %s242, %s258
      %p260 = scmp.eq.s32.totalorder %s26, 0
      %p261 = por %p259, %p260
      %p262 = scmp.le.s32.totalorder 1, %s20
      %p263 = scmp.lt.s32.totalorder %s20, 5
      %p264 = pnand %p262, %p263
      %p265 = pneg %p264
      // Predicated region
      $region9: #{tpu_custom_call.1} parent=5 // pred_check
        _
      $region10: #{tpu_custom_call.1} parent=5 // pred_check_branch
        %267 = sbr.rel (%p264) target = $region12
      $region11: #{tpu_custom_call.1} parent=5 // pred_region
        %s268 = ssub.s32 %s20, 1
        // Predicated region
        $region13: #{tpu_custom_call.1} parent=11 // pred_check
          %p269 = pneg %p79
        $region14: #{tpu_custom_call.1} parent=11 // pred_check_branch
          %271 = sbr.rel (%p269) target = $region16
        $region15: #{tpu_custom_call.1} parent=11 // pred_region
          _
        $region16: #{tpu_custom_call.1} parent=11 // pred_fallthru
          _
        // Predicated region
        $region17: #{tpu_custom_call.1} parent=11 // pred_check
          %p272 = pneg %p100
        $region18: #{tpu_custom_call.1} parent=11 // pred_check_branch
          %274 = sbr.rel (%p272) target = $region20
        $region19: #{tpu_custom_call.1} parent=11 // pred_region
          _
        $region20: #{tpu_custom_call.1} parent=11 // pred_fallthru
          _
        // Predicated region
        $region21: #{tpu_custom_call.1} parent=11 // pred_check
          %p275 = pneg %p121
        $region22: #{tpu_custom_call.1} parent=11 // pred_check_branch
          %277 = sbr.rel (%p275) target = $region24
        $region23: #{tpu_custom_call.1} parent=11 // pred_region
          _
        $region24: #{tpu_custom_call.1} parent=11 // pred_fallthru
          _
        // Predicated region
        $region25: #{tpu_custom_call.1} parent=11 // pred_check
          %p278 = pneg %p142
        $region26: #{tpu_custom_call.1} parent=11 // pred_check_branch
          %280 = sbr.rel (%p278) target = $region28
        $region27: #{tpu_custom_call.1} parent=11 // pred_region
          %282 = vsyncadd [#allocation6], 0
          %s283 = sshll.u32 %s4, 4
          %s284 = int_to_ptr.hbm [resolvable:$true] %s283
          %s285 = sshll.u32 [#allocation5], 4
          %s286 = int_to_ptr.vmem [resolvable:$true] %s285
          %291 = dma.hbm_to_vmem [thread:$0]  %s284, 256, %s286, [#allocation6], 64, 64, 4
        $region28: #{tpu_custom_call.1} parent=11 // pred_fallthru
          _
        // Predicated region
        $region29: #{tpu_custom_call.1} parent=11 // pred_check
          %p292 = pneg %p163
        $region30: #{tpu_custom_call.1} parent=11 // pred_check_branch
          %294 = sbr.rel (%p292) target = $region32
        $region31: #{tpu_custom_call.1} parent=11 // pred_region
          %296 = vsyncadd [#allocation9], 0
          %s297 = sshll.u32 %s5, 4
          %s298 = int_to_ptr.hbm [resolvable:$true] %s297
          %s299 = sshll.u32 [#allocation8], 4
          %s300 = int_to_ptr.vmem [resolvable:$true] %s299
          %305 = dma.hbm_to_vmem [thread:$0]  %s298, 256, %s300, [#allocation9], 64, 64, 4
        $region32: #{tpu_custom_call.1} parent=11 // pred_fallthru
          _
        // Predicated region
        $region33: #{tpu_custom_call.1} parent=11 // pred_check
          %p306 = pneg %p184
        $region34: #{tpu_custom_call.1} parent=11 // pred_check_branch
          %308 = sbr.rel (%p306) target = $region36
        $region35: #{tpu_custom_call.1} parent=11 // pred_region
          _
        $region36: #{tpu_custom_call.1} parent=11 // pred_fallthru
          _
        // Predicated region
        $region37: #{tpu_custom_call.1} parent=11 // pred_check
          %p309 = pneg %p205
        $region38: #{tpu_custom_call.1} parent=11 // pred_check_branch
          %311 = sbr.rel (%p309) target = $region40
        $region39: #{tpu_custom_call.1} parent=11 // pred_region
          %313 = vsyncadd [#allocation9], 0
          %s315 = sshll.u32 %s7, 4
          %s316 = int_to_ptr.hbm [resolvable:$true] %s315
          %s317 = sshll.u32 [#allocation10], 4
          %s318 = int_to_ptr.vmem [resolvable:$true] %s317
          %320 = dma.hbm_to_vmem [thread:$0]  %s316, 128, %s318, [#allocation9]
        $region40: #{tpu_custom_call.1} parent=11 // pred_fallthru
          _
        // Predicated region
        $region41: #{tpu_custom_call.1} parent=11 // pred_check
          %p321 = pneg %p226
        $region42: #{tpu_custom_call.1} parent=11 // pred_check_branch
          %323 = sbr.rel (%p321) target = $region44
        $region43: #{tpu_custom_call.1} parent=11 // pred_region
          _
        $region44: #{tpu_custom_call.1} parent=11 // pred_fallthru
          _
      $region12: #{tpu_custom_call.1} parent=5 // pred_fallthru
        _
      %p324 = scmp.lt.s32.totalorder %s20, 4
      // Predicated region
      $region45: #{tpu_custom_call.1} parent=5 // pred_check
        %p325 = pneg %p324
      $region46: #{tpu_custom_call.1} parent=5 // pred_check_branch
        %327 = sbr.rel (%p325) target = $region48
      $region47: #{tpu_custom_call.1} parent=5 // pred_region
        // Predicated region
        $region49: #{tpu_custom_call.1} parent=47 // pred_check
          %p328 = pneg %p52
        $region50: #{tpu_custom_call.1} parent=47 // pred_check_branch
          %330 = sbr.rel (%p328) target = $region52
        $region51: #{tpu_custom_call.1} parent=47 // pred_region
          %p331 = scmp.lt.s32.totalorder %s27, 1
          %s332 = scalar_select %p331, %s27, 1
          %s333 = smul.addr %s332, 2
          %s334 = smul.addr %s333, 8
          %s335 = scalar_lea.vmem %s0, %s334
        $region52: #{tpu_custom_call.1} parent=47 // pred_fallthru
          _
      $region48: #{tpu_custom_call.1} parent=5 // pred_fallthru
        _
      %p336 = scmp.le.s32.totalorder 1, %s20
      %p337 = scmp.lt.s32.totalorder %s20, 5
      %p338 = pnand %p336, %p337
      %p339 = pneg %p338
      // Predicated region
      $region53: #{tpu_custom_call.1} parent=5 // pred_check
        _
      $region54: #{tpu_custom_call.1} parent=5 // pred_check_branch
        %341 = sbr.rel (%p338) target = $region56
      $region55: #{tpu_custom_call.1} parent=5 // pred_region
        %s342 = ssub.s32 %s20, 1
        // Predicated region
        $region57: #{tpu_custom_call.1} parent=55 // pred_check
          %p343 = pneg %p142
        $region58: #{tpu_custom_call.1} parent=55 // pred_check_branch
          %345 = sbr.rel (%p343) target = $region60
        $region59: #{tpu_custom_call.1} parent=55 // pred_region
          %347 = dma.done [#allocation6], 256
        $region60: #{tpu_custom_call.1} parent=55 // pred_fallthru
          _
        // Predicated region
        $region61: #{tpu_custom_call.1} parent=55 // pred_check
          %p348 = pneg %p163
        $region62: #{tpu_custom_call.1} parent=55 // pred_check_branch
          %350 = sbr.rel (%p348) target = $region64
        $region63: #{tpu_custom_call.1} parent=55 // pred_region
          %352 = dma.done [#allocation9], 256
        $region64: #{tpu_custom_call.1} parent=55 // pred_fallthru
          _
        // Predicated region
        $region65: #{tpu_custom_call.1} parent=55 // pred_check
          %p353 = pneg %p205
        $region66: #{tpu_custom_call.1} parent=55 // pred_check_branch
          %355 = sbr.rel (%p353) target = $region68
        $region67: #{tpu_custom_call.1} parent=55 // pred_region
          %357 = dma.done [#allocation9], 128
        $region68: #{tpu_custom_call.1} parent=55 // pred_fallthru
          _
        %p358 = scmp.lt.s32.totalorder %s29, 1
        %s359 = scalar_select %p358, %s29, 1
        %s360 = smul.addr %s359, 2
        %s361 = smul.addr %s360, 8
        %s362 = scalar_lea.vmem %s0, %s361
        %p363 = pneg %p58
        %p364 = pneg %p55
        %p365 = pneg %p79
        %p366 = pneg %p76
        %p367 = pneg %p100
        %p368 = pneg %p97
        %p369 = pneg %p121
        %p370 = pneg %p118
        %p371 = pneg %p142
        %p372 = pneg %p139
        %p373 = pneg %p163
        %p374 = pneg %p160
        %p375 = pneg %p184
        %p376 = pneg %p181
        %p377 = pneg %p205
        %p378 = pneg %p202
        %p379 = pneg %p226
        %p380 = pneg %p223
        %p381 = pneg %p254
        %p382 = pneg %p251
        %s383 = sand.u32 %s241, 1
        %s384 = scalar_lea.sflag [#allocation7], %s383
        %s385 = sand.u32 %s241, 1
        %s386 = smul.addr %s385, 8
        %s387 = scalar_lea.vmem [#allocation11], %s386
        %p388 = scmp.lt.s32.totalorder %s29, 1
        %s389 = scalar_select %p388, %s29, 1
        %s390 = smul.addr %s389, 2
        %s391 = smul.addr %s390, 8
        %s392 = scalar_lea.vmem %s0, %s391
        %p394 = scmp.eq.s32.totalorder %s30, 0
        // Predicated region
        $region69: #{tpu_custom_call.1} parent=55 // pred_check
          %p395 = pneg %p394
        $region70: #{tpu_custom_call.1} parent=55 // pred_check_branch
          %397 = sbr.rel (%p395) target = $region72
        $region71: #{tpu_custom_call.1} parent=55 // pred_region
          %v398 = vld [vmem:[%s392] sm:$0xff]
          %v399 = vld [vmem:[%s392 + $0x8] sm:$0xff]
          %v400 = vpack.c.bf16 %v399, %v398
          %v401 = vld [vmem:[%s1] sm:$0xf]
          %v402 = vld [vmem:[%s1 + $0x4] sm:$0xf]
          %v403 = vld [vmem:[%s1 + $0x8] sm:$0xf]
          %v404 = vld [vmem:[%s1 + $0xc] sm:$0xf]
          %v409 = vunpack.c.l.b16 %v401
          %v410 = vunpack.c.l.b16 %v402
          %v411 = vunpack.c.l.b16 %v403
          %v412 = vunpack.c.l.b16 %v404
          %v413 = vpack.c.b16 %v410, %v409
          %v414 = vpack.c.b16 %v412, %v411
          %vm417 = vcmask 261120
          %v419 = vsel %vm417, %v400, 0
          %421 = vmatpush.bf16.msra.mxu0 0
          %422 = vmatpush.bf16.msra.mxu0 0
          %423 = vmatpush.bf16.msra.mxu0 0
          %424 = vmatpush.bf16.msra.mxu0 0
          %425 = vmatpush.bf16.msra.mxu0 0
          %426 = vmatpush.bf16.msra.mxu0 0
          %427 = vmatpush.bf16.msra.mxu0 %v414
          %428 = vmatpush.bf16.msra.mxu0 %v413
          %429 = vmatmul.bf16.gmra.mxu0 %v419
          %v430 = vpop.f32.mrf.mxu0
          %v431 = vadd.f32 0.0, %v430
          %v432 = vpop.f32.mrf.mxu0
          %v433 = vadd.f32 0.0, %v432
          %434 = vdwg.mxu0
          %v435 = vpack.c.bf16 %v431, %v431
          %v436 = vpack.c.bf16 %v433, %v433
          %vm437 = vcmask 257024
          %438 = vst.msk [vmem:[#allocation2] sm:$0xf] %vm437, %v435
          %439 = vst.msk [vmem:[#allocation2 + $0x4] sm:$0xf] %vm437, %v436
          %v440 = vld [vmem:[%s3] sm:$0xf]
          %v441 = vld [vmem:[%s3 + $0x4] sm:$0xf]
          %v442 = vld [vmem:[%s3 + $0x8] sm:$0xf]
          %v443 = vld [vmem:[%s3 + $0xc] sm:$0xf]
          %v448 = vunpack.c.l.b16 %v440
          %v449 = vunpack.c.l.b16 %v441
          %v450 = vunpack.c.l.b16 %v442
          %v451 = vunpack.c.l.b16 %v443
          %v452 = vpack.c.b16 %v449, %v448
          %v453 = vpack.c.b16 %v451, %v450
          %456 = vmatpush.bf16.msra.mxu0 0
          %457 = vmatpush.bf16.msra.mxu0 0
          %458 = vmatpush.bf16.msra.mxu0 0
          %459 = vmatpush.bf16.msra.mxu0 0
          %460 = vmatpush.bf16.msra.mxu0 0
          %461 = vmatpush.bf16.msra.mxu0 0
          %462 = vmatpush.bf16.msra.mxu0 %v453
          %463 = vmatpush.bf16.msra.mxu0 %v452
          %464 = vmatmul.bf16.gmra.mxu0 %v419
          %v465 = vpop.f32.mrf.mxu0
          %v466 = vadd.f32 0.0, %v465
          %v467 = vpop.f32.mrf.mxu0
          %v468 = vadd.f32 0.0, %v467
          %469 = vdwg.mxu0
          %v470 = vpack.c.bf16 %v466, %v466
          %v471 = vpack.c.bf16 %v468, %v468
          %472 = vst.msk [vmem:[#allocation3] sm:$0xf] %vm437, %v470
          %473 = vst.msk [vmem:[#allocation3 + $0x4] sm:$0xf] %vm437, %v471
        $region72: #{tpu_custom_call.1} parent=55 // pred_fallthru
          _
        %s474 = smul.u32 %s30, 8
        %s475 = scalar_lea.vmem %s392, %s474
        %v476 = vld [vmem:[%s475] sm:$0xff]
        %v477 = vpack.c.bf16 %v476, %v476
        %v478 = vld [vmem:[%s2] sm:$0xf]
        %v479 = vld [vmem:[%s2 + $0x4] sm:$0xf]
        %v480 = vld [vmem:[%s2 + $0x8] sm:$0xf]
        %v481 = vld [vmem:[%s2 + $0xc] sm:$0xf]
        %v486 = vunpack.c.l.b16 %v478
        %v487 = vunpack.c.l.b16 %v479
        %v488 = vunpack.c.l.b16 %v480
        %v489 = vunpack.c.l.b16 %v481
        %v490 = vpack.c.b16 %v487, %v486
        %v491 = vpack.c.b16 %v489, %v488
        %vm494 = vcmask 261120
        %v496 = vsel %vm494, %v477, 0
        %498 = vmatpush.bf16.msra.mxu0 0
        %499 = vmatpush.bf16.msra.mxu0 0
        %500 = vmatpush.bf16.msra.mxu0 0
        %501 = vmatpush.bf16.msra.mxu0 0
        %502 = vmatpush.bf16.msra.mxu0 0
        %503 = vmatpush.bf16.msra.mxu0 0
        %504 = vmatpush.bf16.msra.mxu0 %v491
        %505 = vmatpush.bf16.msra.mxu0 %v490
        %506 = vmatmul.bf16.gmra.mxu0 %v496
        %v507 = vpop.f32.mrf.mxu0
        %v508 = vadd.f32 0.0, %v507
        %v509 = vpop.f32.mrf.mxu0
        %510 = vdwg.mxu0
        %v511 = vmul.f32 %v508, 0.17677669
        %v512 = vpack.c.bf16 %v511, %v511
        %v513 = vld [vmem:[#allocation2] sm:$0xf]
        %v514 = vld [vmem:[#allocation2 + $0x4] sm:$0xf]
        %v515 = vld [vmem:[#allocation3] sm:$0xf]
        %v516 = vld [vmem:[#allocation3 + $0x4] sm:$0xf]
        %v519 = vunpack.c.l.b16 %v513
        %v520 = vunpack.c.l.b16 %v514
        %v521 = vpack.c.b16 %v520, %v519
        %vm522 = vcmask 31744
        %v524 = vsel %vm522, %v512, 0
        %v527 = vsel %vm522, %v521, 0
        %529 = vmatpush.bf16.xpose.msra.mxu0 0
        %530 = vmatpush.bf16.xpose.msra.mxu0 0
        %531 = vmatpush.bf16.xpose.msra.mxu0 0
        %532 = vmatpush.bf16.xpose.msra.mxu0 0
        %533 = vmatpush.bf16.xpose.msra.mxu0 0
        %534 = vmatpush.bf16.xpose.msra.mxu0 0
        %535 = vmatpush.bf16.xpose.msra.mxu0 0
        %536 = vmatpush.bf16.xpose.msra.mxu0 %v527
        %537 = vmatmul.bf16.gmra.mxu0 %v524
        %v538 = vpop.f32.mrf.mxu0
        %v539 = vadd.f32 0.0, %v538
        %v540 = vpop.f32.mrf.mxu0
        %541 = vdwg.mxu0
        %vm542 = vcmask 130048
        %v543 = vsel %vm542, %v539, -inf
        %544 = vmax.xlane.f32.xlu0 %v543
        %v545 = vpop.xlane.xlu0 %544
        %v546 = vsub.f32 %v539, %v545
        %v547 = vmul.f32 %v546, 1.442695
        %v548 = vpow.pop %v547
        %v549 = vsel %vm542, %v548, 0.0
        %550 = vadd.xlane.f32.xlu0 %v549
        %v551 = vpop.xlane.xlu0 %550
        %v552 = vrcp.pop %v551
        %v553 = vmul.f32 %v551, %v552
        %v554 = vsub.f32 1.0, %v553
        %v555 = vmul.f32 %v552, %v554
        %v556 = vadd.f32 %v552, %v555
        %vm557 = vweird.f32 %v551
        %vm558 = vweird.f32 %v552
        %vm559 = vmor %vm557, %vm558
        %v560 = vsel %vm559, %v552, %v556
        %v561 = vand.u32 2147483647, %v551
        %vm562 = vcmp.eq.f32.partialorder %v561, 8.507059e+37
        %v563 = vand.u32 %v551, 2147483648
        %v564 = vor.u32 1.1754944e-38, %v563
        %v565 = vsel %vm562, %v564, %v560
        %v566 = vmul.f32 %v548, %v565
        %v567 = vpack.c.bf16 %v566, %v566
        %v570 = vunpack.c.l.b16 %v515
        %v571 = vunpack.c.l.b16 %v516
        %v572 = vpack.c.b16 %v571, %v570
        %v575 = vsel %vm542, %v567, 0
        %577 = vmatpush.bf16.msra.mxu0 0
        %578 = vmatpush.bf16.msra.mxu0 0
        %579 = vmatpush.bf16.msra.mxu0 0
        %580 = vmatpush.bf16.msra.mxu0 0
        %581 = vmatpush.bf16.msra.mxu0 0
        %582 = vmatpush.bf16.msra.mxu0 0
        %583 = vmatpush.bf16.msra.mxu0 0
        %584 = vmatpush.bf16.msra.mxu0 %v572
        %585 = vmatmul.bf16.gmra.mxu0 %v575
        %v586 = vpop.f32.mrf.mxu0
        %v587 = vadd.f32 0.0, %v586
        %v588 = vpop.f32.mrf.mxu0
        %589 = vdwg.mxu0
        %590 = vst.msk [vmem:[#allocation4] sm:$0xff] %vm522, %v587
        %v592 = vunpack.c.l.b16 %v512
        %v593 = vpack.c.b16 %v592, %v592
        %594 = vrot.lane.b32.xlu0 %v593, 124
        %v595 = vpop.permute.xlu0 %594
        %596 = vrot.lane.b32.xlu0 %v521, 124
        %v597 = vpop.permute.xlu0 %596
        %v599 = vsel %vm522, %v595, 0
        %v602 = vsel %vm522, %v597, 0
        %604 = vmatpush.bf16.xpose.msra.mxu0 0
        %605 = vmatpush.bf16.xpose.msra.mxu0 0
        %606 = vmatpush.bf16.xpose.msra.mxu0 0
        %607 = vmatpush.bf16.xpose.msra.mxu0 0
        %608 = vmatpush.bf16.xpose.msra.mxu0 0
        %609 = vmatpush.bf16.xpose.msra.mxu0 0
        %610 = vmatpush.bf16.xpose.msra.mxu0 0
        %611 = vmatpush.bf16.xpose.msra.mxu0 %v602
        %612 = vmatmul.bf16.gmra.mxu0 %v599
        %v613 = vpop.f32.mrf.mxu0
        %v614 = vadd.f32 0.0, %v613
        %v615 = vpop.f32.mrf.mxu0
        %616 = vdwg.mxu0
        %v617 = vsel %vm542, %v614, -inf
        %618 = vmax.xlane.f32.xlu0 %v617
        %v619 = vpop.xlane.xlu0 %618
        %v620 = vsub.f32 %v614, %v619
        %v621 = vmul.f32 %v620, 1.442695
        %v622 = vpow.pop %v621
        %v623 = vsel %vm542, %v622, 0.0
        %624 = vadd.xlane.f32.xlu0 %v623
        %v625 = vpop.xlane.xlu0 %624
        %v626 = vrcp.pop %v625
        %v627 = vmul.f32 %v625, %v626
        %v628 = vsub.f32 1.0, %v627
        %v629 = vmul.f32 %v626, %v628
        %v630 = vadd.f32 %v626, %v629
        %vm631 = vweird.f32 %v625
        %vm632 = vweird.f32 %v626
        %vm633 = vmor %vm631, %vm632
        %v634 = vsel %vm633, %v626, %v630
        %v635 = vand.u32 2147483647, %v625
        %vm636 = vcmp.eq.f32.partialorder %v635, 8.507059e+37
        %v637 = vand.u32 %v625, 2147483648
        %v638 = vor.u32 1.1754944e-38, %v637
        %v639 = vsel %vm636, %v638, %v634
        %v640 = vmul.f32 %v622, %v639
        %v641 = vpack.c.bf16 %v640, %v640
        %642 = vrot.lane.b32.xlu0 %v572, 124
        %v643 = vpop.permute.xlu0 %642
        %v646 = vsel %vm542, %v641, 0
        %648 = vmatpush.bf16.msra.mxu0 0
        %649 = vmatpush.bf16.msra.mxu0 0
        %650 = vmatpush.bf16.msra.mxu0 0
        %651 = vmatpush.bf16.msra.mxu0 0
        %652 = vmatpush.bf16.msra.mxu0 0
        %653 = vmatpush.bf16.msra.mxu0 0
        %654 = vmatpush.bf16.msra.mxu0 0
        %655 = vmatpush.bf16.msra.mxu0 %v643
        %656 = vmatmul.bf16.gmra.mxu0 %v646
        %v657 = vpop.f32.mrf.mxu0
        %v658 = vadd.f32 0.0, %v657
        %v659 = vpop.f32.mrf.mxu0
        %660 = vdwg.mxu0
        %662 = vrot.lane.b32.xlu0 %v658, 4
        %v663 = vpop.permute.xlu0 %662
        %vm665 = vcmask 64544
        %666 = vst.msk [vmem:[#allocation4] sm:$0xff] %vm665, %v663
        %667 = vrot.lane.b32.xlu0 %v593, 120
        %v668 = vpop.permute.xlu0 %667
        %669 = vrot.lane.b32.xlu0 %v521, 120
        %v670 = vpop.permute.xlu0 %669
        %v672 = vsel %vm522, %v668, 0
        %v675 = vsel %vm522, %v670, 0
        %677 = vmatpush.bf16.xpose.msra.mxu0 0
        %678 = vmatpush.bf16.xpose.msra.mxu0 0
        %679 = vmatpush.bf16.xpose.msra.mxu0 0
        %680 = vmatpush.bf16.xpose.msra.mxu0 0
        %681 = vmatpush.bf16.xpose.msra.mxu0 0
        %682 = vmatpush.bf16.xpose.msra.mxu0 0
        %683 = vmatpush.bf16.xpose.msra.mxu0 0
        %684 = vmatpush.bf16.xpose.msra.mxu0 %v675
        %685 = vmatmul.bf16.gmra.mxu0 %v672
        %v686 = vpop.f32.mrf.mxu0
        %v687 = vadd.f32 0.0, %v686
        %v688 = vpop.f32.mrf.mxu0
        %689 = vdwg.mxu0
        %v690 = vsel %vm542, %v687, -inf
        %691 = vmax.xlane.f32.xlu0 %v690
        %v692 = vpop.xlane.xlu0 %691
        %v693 = vsub.f32 %v687, %v692
        %v694 = vmul.f32 %v693, 1.442695
        %v695 = vpow.pop %v694
        %v696 = vsel %vm542, %v695, 0.0
        %697 = vadd.xlane.f32.xlu0 %v696
        %v698 = vpop.xlane.xlu0 %697
        %v699 = vrcp.pop %v698
        %v700 = vmul.f32 %v698, %v699
        %v701 = vsub.f32 1.0, %v700
        %v702 = vmul.f32 %v699, %v701
        %v703 = vadd.f32 %v699, %v702
        %vm704 = vweird.f32 %v698
        %vm705 = vweird.f32 %v699
        %vm706 = vmor %vm704, %vm705
        %v707 = vsel %vm706, %v699, %v703
        %v708 = vand.u32 2147483647, %v698
        %vm709 = vcmp.eq.f32.partialorder %v708, 8.507059e+37
        %v710 = vand.u32 %v698, 2147483648
        %v711 = vor.u32 1.1754944e-38, %v710
        %v712 = vsel %vm709, %v711, %v707
        %v713 = vmul.f32 %v695, %v712
        %v714 = vpack.c.bf16 %v713, %v713
        %715 = vrot.lane.b32.xlu0 %v572, 120
        %v716 = vpop.permute.xlu0 %715
        %v719 = vsel %vm542, %v714, 0
        %721 = vmatpush.bf16.msra.mxu0 0
        %722 = vmatpush.bf16.msra.mxu0 0
        %723 = vmatpush.bf16.msra.mxu0 0
        %724 = vmatpush.bf16.msra.mxu0 0
        %725 = vmatpush.bf16.msra.mxu0 0
        %726 = vmatpush.bf16.msra.mxu0 0
        %727 = vmatpush.bf16.msra.mxu0 0
        %728 = vmatpush.bf16.msra.mxu0 %v716
        %729 = vmatmul.bf16.gmra.mxu0 %v719
        %v730 = vpop.f32.mrf.mxu0
        %v731 = vadd.f32 0.0, %v730
        %v732 = vpop.f32.mrf.mxu0
        %733 = vdwg.mxu0
        %735 = vrot.lane.b32.xlu0 %v731, 8
        %v736 = vpop.permute.xlu0 %735
        %vm738 = vcmask 97344
        %739 = vst.msk [vmem:[#allocation4] sm:$0xff] %vm738, %v736
        %740 = vrot.lane.b32.xlu0 %v593, 116
        %v741 = vpop.permute.xlu0 %740
        %742 = vrot.lane.b32.xlu0 %v521, 116
        %v743 = vpop.permute.xlu0 %742
        %v745 = vsel %vm522, %v741, 0
        %v748 = vsel %vm522, %v743, 0
        %750 = vmatpush.bf16.xpose.msra.mxu0 0
        %751 = vmatpush.bf16.xpose.msra.mxu0 0
        %752 = vmatpush.bf16.xpose.msra.mxu0 0
        %753 = vmatpush.bf16.xpose.msra.mxu0 0
        %754 = vmatpush.bf16.xpose.msra.mxu0 0
        %755 = vmatpush.bf16.xpose.msra.mxu0 0
        %756 = vmatpush.bf16.xpose.msra.mxu0 0
        %757 = vmatpush.bf16.xpose.msra.mxu0 %v748
        %758 = vmatmul.bf16.gmra.mxu0 %v745
        %v759 = vpop.f32.mrf.mxu0
        %v760 = vadd.f32 0.0, %v759
        %v761 = vpop.f32.mrf.mxu0
        %762 = vdwg.mxu0
        %v763 = vsel %vm542, %v760, -inf
        %764 = vmax.xlane.f32.xlu0 %v763
        %v765 = vpop.xlane.xlu0 %764
        %v766 = vsub.f32 %v760, %v765
        %v767 = vmul.f32 %v766, 1.442695
        %v768 = vpow.pop %v767
        %v769 = vsel %vm542, %v768, 0.0
        %770 = vadd.xlane.f32.xlu0 %v769
        %v771 = vpop.xlane.xlu0 %770
        %v772 = vrcp.pop %v771
        %v773 = vmul.f32 %v771, %v772
        %v774 = vsub.f32 1.0, %v773
        %v775 = vmul.f32 %v772, %v774
        %v776 = vadd.f32 %v772, %v775
        %vm777 = vweird.f32 %v771
        %vm778 = vweird.f32 %v772
        %vm779 = vmor %vm777, %vm778
        %v780 = vsel %vm779, %v772, %v776
        %v781 = vand.u32 2147483647, %v771
        %vm782 = vcmp.eq.f32.partialorder %v781, 8.507059e+37
        %v783 = vand.u32 %v771, 2147483648
        %v784 = vor.u32 1.1754944e-38, %v783
        %v785 = vsel %vm782, %v784, %v780
        %v786 = vmul.f32 %v768, %v785
        %v787 = vpack.c.bf16 %v786, %v786
        %788 = vrot.lane.b32.xlu0 %v572, 116
        %v789 = vpop.permute.xlu0 %788
        %v792 = vsel %vm542, %v787, 0
        %794 = vmatpush.bf16.msra.mxu0 0
        %795 = vmatpush.bf16.msra.mxu0 0
        %796 = vmatpush.bf16.msra.mxu0 0
        %797 = vmatpush.bf16.msra.mxu0 0
        %798 = vmatpush.bf16.msra.mxu0 0
        %799 = vmatpush.bf16.msra.mxu0 0
        %800 = vmatpush.bf16.msra.mxu0 0
        %801 = vmatpush.bf16.msra.mxu0 %v789
        %802 = vmatmul.bf16.gmra.mxu0 %v792
        %v803 = vpop.f32.mrf.mxu0
        %v804 = vadd.f32 0.0, %v803
        %v805 = vpop.f32.mrf.mxu0
        %806 = vdwg.mxu0
        %808 = vrot.lane.b32.xlu0 %v804, 12
        %v809 = vpop.permute.xlu0 %808
        %vm811 = vcmask 130144
        %812 = vst.msk [vmem:[#allocation4] sm:$0xff] %vm811, %v809
        %813 = vrot.lane.b32.xlu0 %v593, 112
        %v814 = vpop.permute.xlu0 %813
        %815 = vrot.lane.b32.xlu0 %v521, 112
        %v816 = vpop.permute.xlu0 %815
        %v818 = vsel %vm522, %v814, 0
        %v821 = vsel %vm522, %v816, 0
        %823 = vmatpush.bf16.xpose.msra.mxu0 0
        %824 = vmatpush.bf16.xpose.msra.mxu0 0
        %825 = vmatpush.bf16.xpose.msra.mxu0 0
        %826 = vmatpush.bf16.xpose.msra.mxu0 0
        %827 = vmatpush.bf16.xpose.msra.mxu0 0
        %828 = vmatpush.bf16.xpose.msra.mxu0 0
        %829 = vmatpush.bf16.xpose.msra.mxu0 0
        %830 = vmatpush.bf16.xpose.msra.mxu0 %v821
        %831 = vmatmul.bf16.gmra.mxu0 %v818
        %v832 = vpop.f32.mrf.mxu0
        %v833 = vadd.f32 0.0, %v832
        %v834 = vpop.f32.mrf.mxu0
        %835 = vdwg.mxu0
        %v836 = vsel %vm542, %v833, -inf
        %837 = vmax.xlane.f32.xlu0 %v836
        %v838 = vpop.xlane.xlu0 %837
        %v839 = vsub.f32 %v833, %v838
        %v840 = vmul.f32 %v839, 1.442695
        %v841 = vpow.pop %v840
        %v842 = vsel %vm542, %v841, 0.0
        %843 = vadd.xlane.f32.xlu0 %v842
        %v844 = vpop.xlane.xlu0 %843
        %v845 = vrcp.pop %v844
        %v846 = vmul.f32 %v844, %v845
        %v847 = vsub.f32 1.0, %v846
        %v848 = vmul.f32 %v845, %v847
        %v849 = vadd.f32 %v845, %v848
        %vm850 = vweird.f32 %v844
        %vm851 = vweird.f32 %v845
        %vm852 = vmor %vm850, %vm851
        %v853 = vsel %vm852, %v845, %v849
        %v854 = vand.u32 2147483647, %v844
        %vm855 = vcmp.eq.f32.partialorder %v854, 8.507059e+37
        %v856 = vand.u32 %v844, 2147483648
        %v857 = vor.u32 1.1754944e-38, %v856
        %v858 = vsel %vm855, %v857, %v853
        %v859 = vmul.f32 %v841, %v858
        %v860 = vpack.c.bf16 %v859, %v859
        %861 = vrot.lane.b32.xlu0 %v572, 112
        %v862 = vpop.permute.xlu0 %861
        %v865 = vsel %vm542, %v860, 0
        %867 = vmatpush.bf16.msra.mxu0 0
        %868 = vmatpush.bf16.msra.mxu0 0
        %869 = vmatpush.bf16.msra.mxu0 0
        %870 = vmatpush.bf16.msra.mxu0 0
        %871 = vmatpush.bf16.msra.mxu0 0
        %872 = vmatpush.bf16.msra.mxu0 0
        %873 = vmatpush.bf16.msra.mxu0 0
        %874 = vmatpush.bf16.msra.mxu0 %v862
        %875 = vmatmul.bf16.gmra.mxu0 %v865
        %v876 = vpop.f32.mrf.mxu0
        %v877 = vadd.f32 0.0, %v876
        %v878 = vpop.f32.mrf.mxu0
        %879 = vdwg.mxu0
        %881 = vrot.lane.b32.xlu0 %v877, 16
        %v882 = vpop.permute.xlu0 %881
        %vm884 = vcmask 162944
        %885 = vst.msk [vmem:[#allocation4] sm:$0xff] %vm884, %v882
        %886 = vrot.lane.b32.xlu0 %v593, 108
        %v887 = vpop.permute.xlu0 %886
        %888 = vrot.lane.b32.xlu0 %v521, 108
        %v889 = vpop.permute.xlu0 %888
        %v891 = vsel %vm522, %v887, 0
        %v894 = vsel %vm522, %v889, 0
        %896 = vmatpush.bf16.xpose.msra.mxu0 0
        %897 = vmatpush.bf16.xpose.msra.mxu0 0
        %898 = vmatpush.bf16.xpose.msra.mxu0 0
        %899 = vmatpush.bf16.xpose.msra.mxu0 0
        %900 = vmatpush.bf16.xpose.msra.mxu0 0
        %901 = vmatpush.bf16.xpose.msra.mxu0 0
        %902 = vmatpush.bf16.xpose.msra.mxu0 0
        %903 = vmatpush.bf16.xpose.msra.mxu0 %v894
        %904 = vmatmul.bf16.gmra.mxu0 %v891
        %v905 = vpop.f32.mrf.mxu0
        %v906 = vadd.f32 0.0, %v905
        %v907 = vpop.f32.mrf.mxu0
        %908 = vdwg.mxu0
        %v909 = vsel %vm542, %v906, -inf
        %910 = vmax.xlane.f32.xlu0 %v909
        %v911 = vpop.xlane.xlu0 %910
        %v912 = vsub.f32 %v906, %v911
        %v913 = vmul.f32 %v912, 1.442695
        %v914 = vpow.pop %v913
        %v915 = vsel %vm542, %v914, 0.0
        %916 = vadd.xlane.f32.xlu0 %v915
        %v917 = vpop.xlane.xlu0 %916
        %v918 = vrcp.pop %v917
        %v919 = vmul.f32 %v917, %v918
        %v920 = vsub.f32 1.0, %v919
        %v921 = vmul.f32 %v918, %v920
        %v922 = vadd.f32 %v918, %v921
        %vm923 = vweird.f32 %v917
        %vm924 = vweird.f32 %v918
        %vm925 = vmor %vm923, %vm924
        %v926 = vsel %vm925, %v918, %v922
        %v927 = vand.u32 2147483647, %v917
        %vm928 = vcmp.eq.f32.partialorder %v927, 8.507059e+37
        %v929 = vand.u32 %v917, 2147483648
        %v930 = vor.u32 1.1754944e-38, %v929
        %v931 = vsel %vm928, %v930, %v926
        %v932 = vmul.f32 %v914, %v931
        %v933 = vpack.c.bf16 %v932, %v932
        %934 = vrot.lane.b32.xlu0 %v572, 108
        %v935 = vpop.permute.xlu0 %934
        %v938 = vsel %vm542, %v933, 0
        %940 = vmatpush.bf16.msra.mxu0 0
        %941 = vmatpush.bf16.msra.mxu0 0
        %942 = vmatpush.bf16.msra.mxu0 0
        %943 = vmatpush.bf16.msra.mxu0 0
        %944 = vmatpush.bf16.msra.mxu0 0
        %945 = vmatpush.bf16.msra.mxu0 0
        %946 = vmatpush.bf16.msra.mxu0 0
        %947 = vmatpush.bf16.msra.mxu0 %v935
        %948 = vmatmul.bf16.gmra.mxu0 %v938
        %v949 = vpop.f32.mrf.mxu0
        %v950 = vadd.f32 0.0, %v949
        %v951 = vpop.f32.mrf.mxu0
        %952 = vdwg.mxu0
        %954 = vrot.lane.b32.xlu0 %v950, 20
        %v955 = vpop.permute.xlu0 %954
        %vm957 = vcmask 195744
        %958 = vst.msk [vmem:[#allocation4] sm:$0xff] %vm957, %v955
        %959 = vrot.lane.b32.xlu0 %v593, 104
        %v960 = vpop.permute.xlu0 %959
        %961 = vrot.lane.b32.xlu0 %v521, 104
        %v962 = vpop.permute.xlu0 %961
        %v964 = vsel %vm522, %v960, 0
        %v967 = vsel %vm522, %v962, 0
        %969 = vmatpush.bf16.xpose.msra.mxu0 0
        %970 = vmatpush.bf16.xpose.msra.mxu0 0
        %971 = vmatpush.bf16.xpose.msra.mxu0 0
        %972 = vmatpush.bf16.xpose.msra.mxu0 0
        %973 = vmatpush.bf16.xpose.msra.mxu0 0
        %974 = vmatpush.bf16.xpose.msra.mxu0 0
        %975 = vmatpush.bf16.xpose.msra.mxu0 0
        %976 = vmatpush.bf16.xpose.msra.mxu0 %v967
        %977 = vmatmul.bf16.gmra.mxu0 %v964
        %v978 = vpop.f32.mrf.mxu0
        %v979 = vadd.f32 0.0, %v978
        %v980 = vpop.f32.mrf.mxu0
        %981 = vdwg.mxu0
        %v982 = vsel %vm542, %v979, -inf
        %983 = vmax.xlane.f32.xlu0 %v982
        %v984 = vpop.xlane.xlu0 %983
        %v985 = vsub.f32 %v979, %v984
        %v986 = vmul.f32 %v985, 1.442695
        %v987 = vpow.pop %v986
        %v988 = vsel %vm542, %v987, 0.0
        %989 = vadd.xlane.f32.xlu0 %v988
        %v990 = vpop.xlane.xlu0 %989
        %v991 = vrcp.pop %v990
        %v992 = vmul.f32 %v990, %v991
        %v993 = vsub.f32 1.0, %v992
        %v994 = vmul.f32 %v991, %v993
        %v995 = vadd.f32 %v991, %v994
        %vm996 = vweird.f32 %v990
        %vm997 = vweird.f32 %v991
        %vm998 = vmor %vm996, %vm997
        %v999 = vsel %vm998, %v991, %v995
        %v1000 = vand.u32 2147483647, %v990
        %vm1001 = vcmp.eq.f32.partialorder %v1000, 8.507059e+37
        %v1002 = vand.u32 %v990, 2147483648
        %v1003 = vor.u32 1.1754944e-38, %v1002
        %v1004 = vsel %vm1001, %v1003, %v999
        %v1005 = vmul.f32 %v987, %v1004
        %v1006 = vpack.c.bf16 %v1005, %v1005
        %1007 = vrot.lane.b32.xlu0 %v572, 104
        %v1008 = vpop.permute.xlu0 %1007
        %v1011 = vsel %vm542, %v1006, 0
        %1013 = vmatpush.bf16.msra.mxu0 0
        %1014 = vmatpush.bf16.msra.mxu0 0
        %1015 = vmatpush.bf16.msra.mxu0 0
        %1016 = vmatpush.bf16.msra.mxu0 0
        %1017 = vmatpush.bf16.msra.mxu0 0
        %1018 = vmatpush.bf16.msra.mxu0 0
        %1019 = vmatpush.bf16.msra.mxu0 0
        %1020 = vmatpush.bf16.msra.mxu0 %v1008
        %1021 = vmatmul.bf16.gmra.mxu0 %v1011
        %v1022 = vpop.f32.mrf.mxu0
        %v1023 = vadd.f32 0.0, %v1022
        %v1024 = vpop.f32.mrf.mxu0
        %1025 = vdwg.mxu0
        %1027 = vrot.lane.b32.xlu0 %v1023, 24
        %v1028 = vpop.permute.xlu0 %1027
        %vm1030 = vcmask 228544
        %1031 = vst.msk [vmem:[#allocation4] sm:$0xff] %vm1030, %v1028
        %1032 = vrot.lane.b32.xlu0 %v593, 100
        %v1033 = vpop.permute.xlu0 %1032
        %1034 = vrot.lane.b32.xlu0 %v521, 100
        %v1035 = vpop.permute.xlu0 %1034
        %v1037 = vsel %vm522, %v1033, 0
        %v1040 = vsel %vm522, %v1035, 0
        %1042 = vmatpush.bf16.xpose.msra.mxu0 0
        %1043 = vmatpush.bf16.xpose.msra.mxu0 0
        %1044 = vmatpush.bf16.xpose.msra.mxu0 0
        %1045 = vmatpush.bf16.xpose.msra.mxu0 0
        %1046 = vmatpush.bf16.xpose.msra.mxu0 0
        %1047 = vmatpush.bf16.xpose.msra.mxu0 0
        %1048 = vmatpush.bf16.xpose.msra.mxu0 0
        %1049 = vmatpush.bf16.xpose.msra.mxu0 %v1040
        %1050 = vmatmul.bf16.gmra.mxu0 %v1037
        %v1051 = vpop.f32.mrf.mxu0
        %v1052 = vadd.f32 0.0, %v1051
        %v1053 = vpop.f32.mrf.mxu0
        %1054 = vdwg.mxu0
        %v1055 = vsel %vm542, %v1052, -inf
        %1056 = vmax.xlane.f32.xlu0 %v1055
        %v1057 = vpop.xlane.xlu0 %1056
        %v1058 = vsub.f32 %v1052, %v1057
        %v1059 = vmul.f32 %v1058, 1.442695
        %v1060 = vpow.pop %v1059
        %v1061 = vsel %vm542, %v1060, 0.0
        %1062 = vadd.xlane.f32.xlu0 %v1061
        %v1063 = vpop.xlane.xlu0 %1062
        %v1064 = vrcp.pop %v1063
        %v1065 = vmul.f32 %v1063, %v1064
        %v1066 = vsub.f32 1.0, %v1065
        %v1067 = vmul.f32 %v1064, %v1066
        %v1068 = vadd.f32 %v1064, %v1067
        %vm1069 = vweird.f32 %v1063
        %vm1070 = vweird.f32 %v1064
        %vm1071 = vmor %vm1069, %vm1070
        %v1072 = vsel %vm1071, %v1064, %v1068
        %v1073 = vand.u32 2147483647, %v1063
        %vm1074 = vcmp.eq.f32.partialorder %v1073, 8.507059e+37
        %v1075 = vand.u32 %v1063, 2147483648
        %v1076 = vor.u32 1.1754944e-38, %v1075
        %v1077 = vsel %vm1074, %v1076, %v1072
        %v1078 = vmul.f32 %v1060, %v1077
        %v1079 = vpack.c.bf16 %v1078, %v1078
        %1080 = vrot.lane.b32.xlu0 %v572, 100
        %v1081 = vpop.permute.xlu0 %1080
        %v1084 = vsel %vm542, %v1079, 0
        %1086 = vmatpush.bf16.msra.mxu0 0
        %1087 = vmatpush.bf16.msra.mxu0 0
        %1088 = vmatpush.bf16.msra.mxu0 0
        %1089 = vmatpush.bf16.msra.mxu0 0
        %1090 = vmatpush.bf16.msra.mxu0 0
        %1091 = vmatpush.bf16.msra.mxu0 0
        %1092 = vmatpush.bf16.msra.mxu0 0
        %1093 = vmatpush.bf16.msra.mxu0 %v1081
        %1094 = vmatmul.bf16.gmra.mxu0 %v1084
        %v1095 = vpop.f32.mrf.mxu0
        %v1096 = vadd.f32 0.0, %v1095
        %v1097 = vpop.f32.mrf.mxu0
        %1098 = vdwg.mxu0
        %1100 = vrot.lane.b32.xlu0 %v1096, 28
        %v1101 = vpop.permute.xlu0 %1100
        %vm1103 = vcmask 261344
        %1104 = vst.msk [vmem:[#allocation4] sm:$0xff] %vm1103, %v1101
        %v1105 = vld [vmem:[#allocation10] sm:$0x3f]
        %v1106 = vld [vmem:[#allocation4] sm:$0xff]
        %v1107 = vpack.c.bf16 %v1106, %v1106
        %v1108 = vld [vmem:[#allocation5] sm:$0xf]
        %v1109 = vld [vmem:[#allocation5 + $0x4] sm:$0xf]
        %v1110 = vld [vmem:[#allocation5 + $0x8] sm:$0xf]
        %v1111 = vld [vmem:[#allocation5 + $0xc] sm:$0xf]
        %v1112 = vperm.slane %v1105, 0
        %v1117 = vunpack.c.l.b16 %v1108
        %v1118 = vunpack.c.l.b16 %v1109
        %v1119 = vunpack.c.l.b16 %v1110
        %v1120 = vunpack.c.l.b16 %v1111
        %v1121 = vpack.c.b16 %v1118, %v1117
        %v1122 = vpack.c.b16 %v1120, %v1119
        %v1126 = vsel %vm494, %v1107, 0
        %1128 = vmatpush.bf16.msra.mxu0 0
        %1129 = vmatpush.bf16.msra.mxu0 0
        %1130 = vmatpush.bf16.msra.mxu0 0
        %1131 = vmatpush.bf16.msra.mxu0 0
        %1132 = vmatpush.bf16.msra.mxu0 0
        %1133 = vmatpush.bf16.msra.mxu0 0
        %1134 = vmatpush.bf16.msra.mxu0 %v1122
        %1135 = vmatpush.bf16.msra.mxu0 %v1121
        %1136 = vmatmul.bf16.gmra.mxu0 %v1126
        %v1137 = vpop.f32.mrf.mxu0
        %v1138 = vadd.f32 %v1112, %v1137
        %v1139 = vpop.f32.mrf.mxu0
        %1140 = vdwg.mxu0
        %v1141 = vadd.f32 %v476, %v1138
        %v1142 = vsel %vm494, %v1141, 0.0
        %1143 = vadd.xlane.f32.xlu0 %v1142
        %v1144 = vpop.xlane.xlu0 %1143
        %v1145 = vrcp.pop 32.0
        %v1146 = vmul.f32 32.0, %v1145
        %v1147 = vsub.f32 1.0, %v1146
        %v1148 = vmul.f32 %v1145, %v1147
        %v1149 = vadd.f32 %v1145, %v1148
        %vm1150 = vweird.f32 %v1145
        %v1151 = vsel %vm1150, %v1145, %v1149
        %v1152 = vmul.f32 %v1144, %v1151
        %v1153 = vsub.f32 %v1141, %v1152
        %v1154 = vmul.f32 %v1153, %v1153
        %v1155 = vsel %vm494, %v1154, 0.0
        %1156 = vadd.xlane.f32.xlu0 %v1155
        %v1157 = vpop.xlane.xlu0 %1156
        %v1158 = vmul.f32 %v1157, %v1151
        %v1159 = vadd.f32 %v1158, 1e-05
        %v1160 = vrsqrt.pop %v1159
        %v1161 = vmul.f32 %v1160, %v1159
        %v1162 = vmul.f32 %v1161, %v1160
        %v1163 = vmul.f32 0.5, %v1162
        %v1164 = vsub.f32 1.5, %v1163
        %v1165 = vmul.f32 %v1160, %v1164
        %vm1166 = vweird.f32 %v1159
        %vm1167 = vweird.f32 %v1160
        %vm1168 = vmor %vm1166, %vm1167
        %v1169 = vsel %vm1168, %v1160, %v1165
        %v1170 = vmul.f32 %v1153, %v1169
        %v1171 = vperm.slane %v1105, 1
        %v1172 = vmul.f32 %v1170, %v1171
        %v1173 = vperm.slane %v1105, 2
        %v1174 = vadd.f32 %v1172, %v1173
        %v1175 = vpack.c.bf16 %v1174, %v1174
        %v1176 = vld [vmem:[#allocation8] sm:$0xf]
        %v1177 = vld [vmem:[#allocation8 + $0x4] sm:$0xf]
        %v1178 = vld [vmem:[#allocation8 + $0x8] sm:$0xf]
        %v1179 = vld [vmem:[#allocation8 + $0xc] sm:$0xf]
        %v1180 = vld [vmem:[%s8] sm:$0x1]
        %v1182 = vperm.slane %v1180, 0
        %v1188 = vunpack.c.l.b16 %v1176
        %v1189 = vunpack.c.l.b16 %v1177
        %v1190 = vunpack.c.l.b16 %v1178
        %v1191 = vunpack.c.l.b16 %v1179
        %v1192 = vpack.c.b16 %v1189, %v1188
        %v1193 = vpack.c.b16 %v1191, %v1190
        %v1197 = vsel %vm494, %v1175, 0
        %1199 = vmatpush.bf16.msra.mxu0 0
        %1200 = vmatpush.bf16.msra.mxu0 0
        %1201 = vmatpush.bf16.msra.mxu0 0
        %1202 = vmatpush.bf16.msra.mxu0 0
        %1203 = vmatpush.bf16.msra.mxu0 0
        %1204 = vmatpush.bf16.msra.mxu0 0
        %1205 = vmatpush.bf16.msra.mxu0 %v1193
        %1206 = vmatpush.bf16.msra.mxu0 %v1192
        %1207 = vmatmul.bf16.gmra.mxu0 %v1197
        %v1208 = vpop.f32.mrf.mxu0
        %v1209 = vadd.f32 %v1182, %v1208
        %v1210 = vpop.f32.mrf.mxu0
        %1211 = vdwg.mxu0
        %v1212 = vmax.f32 %v1209, 0.0
        %v1213 = vpack.c.bf16 %v1212, %v1212
        %v1214 = vld [vmem:[%s6] sm:$0xf]
        %v1215 = vld [vmem:[%s6 + $0x4] sm:$0xf]
        %v1216 = vld [vmem:[%s6 + $0x8] sm:$0xf]
        %v1217 = vld [vmem:[%s6 + $0xc] sm:$0xf]
        %v1218 = vld [vmem:[%s6 + $0x10] sm:$0xf]
        %v1219 = vld [vmem:[%s6 + $0x14] sm:$0xf]
        %v1220 = vld [vmem:[%s6 + $0x18] sm:$0xf]
        %v1221 = vld [vmem:[%s6 + $0x1c] sm:$0xf]
        %v1222 = vld [vmem:[%s6 + $0x20] sm:$0xf]
        %v1223 = vld [vmem:[%s6 + $0x24] sm:$0xf]
        %v1224 = vld [vmem:[%s6 + $0x28] sm:$0xf]
        %v1225 = vld [vmem:[%s6 + $0x2c] sm:$0xf]
        %v1226 = vld [vmem:[%s6 + $0x30] sm:$0xf]
        %v1227 = vld [vmem:[%s6 + $0x34] sm:$0xf]
        %v1228 = vld [vmem:[%s6 + $0x38] sm:$0xf]
        %v1229 = vld [vmem:[%s6 + $0x3c] sm:$0xf]
        %v1230 = vperm.slane %v1105, 3
        %v1247 = vunpack.c.l.b16 %v1214
        %v1248 = vunpack.c.l.b16 %v1215
        %v1249 = vunpack.c.l.b16 %v1216
        %v1250 = vunpack.c.l.b16 %v1217
        %v1251 = vunpack.c.l.b16 %v1218
        %v1252 = vunpack.c.l.b16 %v1219
        %v1253 = vunpack.c.l.b16 %v1220
        %v1254 = vunpack.c.l.b16 %v1221
        %v1255 = vunpack.c.l.b16 %v1222
        %v1256 = vunpack.c.l.b16 %v1223
        %v1257 = vunpack.c.l.b16 %v1224
        %v1258 = vunpack.c.l.b16 %v1225
        %v1259 = vunpack.c.l.b16 %v1226
        %v1260 = vunpack.c.l.b16 %v1227
        %v1261 = vunpack.c.l.b16 %v1228
        %v1262 = vunpack.c.l.b16 %v1229
        %v1263 = vpack.c.b16 %v1248, %v1247
        %v1264 = vpack.c.b16 %v1250, %v1249
        %v1265 = vpack.c.b16 %v1252, %v1251
        %v1266 = vpack.c.b16 %v1254, %v1253
        %v1267 = vpack.c.b16 %v1256, %v1255
        %v1268 = vpack.c.b16 %v1258, %v1257
        %v1269 = vpack.c.b16 %v1260, %v1259
        %v1270 = vpack.c.b16 %v1262, %v1261
        %1279 = vmatpush.bf16.msra.mxu0 %v1270
        %1280 = vmatpush.bf16.msra.mxu0 %v1269
        %1281 = vmatpush.bf16.msra.mxu0 %v1268
        %1282 = vmatpush.bf16.msra.mxu0 %v1267
        %1283 = vmatpush.bf16.msra.mxu0 %v1266
        %1284 = vmatpush.bf16.msra.mxu0 %v1265
        %1285 = vmatpush.bf16.msra.mxu0 %v1264
        %1286 = vmatpush.bf16.msra.mxu0 %v1263
        %1287 = vmatmul.bf16.gmra.mxu0 %v1213
        %v1288 = vpop.f32.mrf.mxu0
        %v1289 = vadd.f32 %v1230, %v1288
        %v1290 = vpop.f32.mrf.mxu0
        %1291 = vdwg.mxu0
        %v1292 = vadd.f32 %v1289, %v1174
        %v1293 = vsel %vm494, %v1292, 0.0
        %1294 = vadd.xlane.f32.xlu0 %v1293
        %v1295 = vpop.xlane.xlu0 %1294
        %v1296 = vmul.f32 %v1295, %v1151
        %v1297 = vsub.f32 %v1292, %v1296
        %v1298 = vmul.f32 %v1297, %v1297
        %v1299 = vsel %vm494, %v1298, 0.0
        %1300 = vadd.xlane.f32.xlu0 %v1299
        %v1301 = vpop.xlane.xlu0 %1300
        %v1302 = vmul.f32 %v1301, %v1151
        %v1303 = vadd.f32 %v1302, 1e-05
        %v1304 = vrsqrt.pop %v1303
        %v1305 = vmul.f32 %v1304, %v1303
        %v1306 = vmul.f32 %v1305, %v1304
        %v1307 = vmul.f32 0.5, %v1306
        %v1308 = vsub.f32 1.5, %v1307
        %v1309 = vmul.f32 %v1304, %v1308
        %vm1310 = vweird.f32 %v1303
        %vm1311 = vweird.f32 %v1304
        %vm1312 = vmor %vm1310, %vm1311
        %v1313 = vsel %vm1312, %v1304, %v1309
        %v1314 = vmul.f32 %v1297, %v1313
        %v1315 = vperm.slane %v1105, 4
        %v1316 = vmul.f32 %v1314, %v1315
        %v1317 = vperm.slane %v1105, 5
        %v1318 = vadd.f32 %v1316, %v1317
        %1319 = vst.msk [vmem:[%s387] sm:$0xff] %vm494, %v1318
        %s1320 = sand.u32 %s241, 1
        %s1321 = scalar_lea.sflag [#allocation7], %s1320
        %s1322 = sand.u32 %s241, 1
        %s1323 = smul.addr %s1322, 8
        %s1324 = scalar_lea.vmem [#allocation11], %s1323
        // Predicated region
        $region73: #{tpu_custom_call.1} parent=55 // pred_check
          %p1325 = pneg %p251
        $region74: #{tpu_custom_call.1} parent=55 // pred_check_branch
          %1327 = sbr.rel (%p1325) target = $region76
        $region75: #{tpu_custom_call.1} parent=55 // pred_region
          %1329 = vsyncadd %s1321, 0
          %s1330 = smul.addr %s29, 2
          %s1331 = sadd.s32 %s30, %s1330
          %s1332 = smul.addr %s1331, 8
          %s1333 = scalar_lea.hbm %s9, %s1332
          %s1335 = sshll.u32 %s1324, 4
          %s1336 = int_to_ptr.vmem [resolvable:$true] %s1335
          %s1337 = sshll.u32 %s1333, 4
          %s1338 = int_to_ptr.hbm [resolvable:$true] %s1337
          %1340 = dma.vmem_to_hbm [thread:$0]  %s1336, 128, %s1338, %s1321
        $region76: #{tpu_custom_call.1} parent=55 // pred_fallthru
          _
      $region56: #{tpu_custom_call.1} parent=5 // pred_fallthru
        _
      %p1341 = scmp.le.s32.totalorder 2, %s20
      // Predicated region
      $region77: #{tpu_custom_call.1} parent=5 // pred_check
        %p1342 = pneg %p1341
      $region78: #{tpu_custom_call.1} parent=5 // pred_check_branch
        %1344 = sbr.rel (%p1342) target = $region80
      $region79: #{tpu_custom_call.1} parent=5 // pred_region
        %s1345 = ssub.s32 %s20, 2
        // Predicated region
        $region81: #{tpu_custom_call.1} parent=79 // pred_check
          %p1346 = pneg %p257
        $region82: #{tpu_custom_call.1} parent=79 // pred_check_branch
          %1348 = sbr.rel (%p1346) target = $region84
        $region83: #{tpu_custom_call.1} parent=79 // pred_region
          %s1349 = sand.u32 %s242, 1
          %s1350 = scalar_lea.sflag [#allocation7], %s1349
          %s1351 = sand.u32 %s242, 1
          %s1352 = smul.addr %s1351, 8
          %s1353 = scalar_lea.vmem [#allocation11], %s1352
          %1355 = dma.done %s1350, 128
        $region84: #{tpu_custom_call.1} parent=79 // pred_fallthru
          _
      $region80: #{tpu_custom_call.1} parent=5 // pred_fallthru
        _
    $region6: #{tpu_custom_call.1} parent=1 // loop_footer
      %s24 = sadd.s32 1, %s20
    $region7: #{tpu_custom_call.1} parent=1 // loop_footer_branch
      %19 = sbr.rel target = $region3
    $region8: #{tpu_custom_call.1} parent=1 // loop_exit
      _
    %1356 = vsyncpa [#allocation6], 1
    %s1357 = scalar_lea.sflag [#allocation6], 1
    %1358 = vsyncpa %s1357, 1
    %1359 = vsyncpa [#allocation9], 1
    %1360 = vsyncpa [#allocation7], 1
    %s1361 = scalar_lea.sflag [#allocation7], 1
    %1362 = vsyncpa %s1361, 1

</llo_original>
